<compile_context>
chip_gen: v6e
topology: v6e:2x2x1
jax: 0.10.0
libtpu: 0.0.40
codegen_flags: <defaults>
</compile_context>

<pallas_src>
import functools

import jax
import jax.numpy as jnp
import numpy as np
from jax.experimental import pallas as pl
from jax.experimental.pallas import tpu as pltpu


# 3x3 tap offsets, row-major (kh, kw) -> (dh, dw); must match the weight
# flattening and the mask table ordering below.
_OFFSETS = tuple((dh, dw) for dh in (-1, 0, 1) for dw in (-1, 0, 1))


def _taps(img, masks, W):
    """Build the transposed im2col matrix entirely in VMEM.

    img:   (C, H*W)  -- channels-first, spatial flattened on lanes
    masks: (9, H*W)  -- 1.0 where the tap stays inside the image, else 0.0
    returns (9*C, H*W): row (k*C + c) = channel c shifted by tap k, zero-padded
    at the borders (matches a 'same' 3x3 conv / nn.Conv2d(padding=1)).
    """
    C, HW = img.shape
    pieces = []
    for k, (dh, dw) in enumerate(_OFFSETS):
        s = dh * W + dw
        if s > 0:
            sh = jnp.concatenate(
                [img[:, s:], jnp.zeros((C, s), img.dtype)], axis=1)
        elif s < 0:
            sh = jnp.concatenate(
                [jnp.zeros((C, -s), img.dtype), img[:, :HW + s]], axis=1)
        else:
            sh = img
        # border mask kills row-boundary / top-bottom bleed of the flat shift
        pieces.append(sh * masks[k:k + 1, :])
    return jnp.concatenate(pieces, axis=0)  # (9*C, HW)


def _ddpm_fused_kernel(sa_ref, soma_ref, x_ref, noise_ref, cond_ref, masks_ref,
                       w1_ref, bt1_ref, w2_ref, b2_ref, out_ref, *, W, eps):
    i = pl.program_id(0)
    sa = sa_ref[i]          # sqrt_alphas_cumprod[t_i]        (SMEM scalar)
    soma = soma_ref[i]      # sqrt_one_minus_alphas_cumprod[t_i]

    x = x_ref[0]            # (C, HW) f32
    noise = noise_ref[0]    # (C, HW) f32
    cond = cond_ref[0]      # (Cc, HW) f32
    masks = masks_ref[...]  # (9, HW) bf16

    # 1) perturb_x (q-sample), f32
    pred = sa * x + soma * noise

    # 2) channel concat with condition (sublane concat), cast to bf16 for MXU
    inp = jnp.concatenate(
        [pred.astype(jnp.bfloat16), cond.astype(jnp.bfloat16)], axis=0)

    # 3) conv3x3 #1: taps folded into K -> single MXU matmul, f32 accumulate
    cols1 = _taps(inp, masks, W)                                # (9*Cin, HW)
    h = jnp.dot(w1_ref[...], cols1,
                preferred_element_type=jnp.float32)             # (hidden, HW)

    # 4) + (bias1 + temb[t]) precombined in glue, ReLU
    h = jnp.maximum(h + bt1_ref[0], 0.0)

    # 5) conv3x3 #2 (no temb), single MXU matmul
    cols2 = _taps(h.astype(jnp.bfloat16), masks, W)             # (9*hidden, HW)
    pred_noise = jnp.dot(w2_ref[...], cols2,
                         preferred_element_type=jnp.float32)    # (Cout, HW)
    pred_noise = pred_noise + b2_ref[...]                       # (Cout,1) bcast

    # 6) Charbonnier partials: sum over channels, keep lane-dense (1, HW) row
    diff = pred_noise - noise
    out_ref[0] = jnp.sum(jnp.sqrt(diff * diff + eps * eps),
                         axis=0, keepdims=True)


@functools.lru_cache(maxsize=8)
def _tap_masks(H, W):
    """(9, H*W) bf16 validity masks for the 9 taps of a 'same' 3x3 conv."""
    hh = np.repeat(np.arange(H), W)
    ww = np.tile(np.arange(W), H)
    ms = []
    for dh, dw in _OFFSETS:
        valid = ((hh + dh >= 0) & (hh + dh < H) &
                 (ww + dw >= 0) & (ww + dw < W))
        ms.append(valid.astype(np.float32))
    return jnp.asarray(np.stack(ms, axis=0), dtype=jnp.bfloat16)


class DDPMPallas:
    """Forward/compute_loss path of the ID_Blau DDPM, fused into one kernel."""

    def __init__(self, num_timesteps=8, img_channels=3, cond_channels=3,
                 hidden=32, key=None):
        self.num_timesteps = num_timesteps
        self.img_channels = img_channels
        self.cond_channels = cond_channels
        self.hidden = hidden

        # diffusion schedule buffers (same math as the torch module)
        betas = np.linspace(1e-4, 2e-2, num_timesteps).astype(np.float64)
        alphas = 1.0 - betas
        alphas_cumprod = np.cumprod(alphas)
        self.sqrt_alphas_cumprod = jnp.asarray(
            np.sqrt(alphas_cumprod), jnp.float32)
        self.sqrt_one_minus_alphas_cumprod = jnp.asarray(
            np.sqrt(1.0 - alphas_cumprod), jnp.float32)

        # synthetic stand-in denoiser parameters (deterministic)
        if key is None:
            key = jax.random.PRNGKey(42)
        k1, k2, k3, k4, k5 = jax.random.split(key, 5)
        cin = img_channels + cond_channels

        w1 = 0.1 * jax.random.normal(k1, (3, 3, cin, hidden), jnp.float32)
        # flattened-transposed conv weights: (Cout, 9*Cin), tap-major K, bf16
        self.w1t = jnp.transpose(w1.reshape(9, cin, hidden),
                                 (2, 0, 1)).reshape(hidden, 9 * cin)
        self.w1t = self.w1t.astype(jnp.bfloat16)
        self.b1 = 0.01 * jax.random.normal(k4, (hidden,), jnp.float32)
        self.temb_table = 0.1 * jax.random.normal(
            k2, (num_timesteps, hidden), jnp.float32)

        w2 = 0.1 * jax.random.normal(
            k3, (3, 3, hidden, img_channels), jnp.float32)
        self.w2t = jnp.transpose(w2.reshape(9, hidden, img_channels),
                                 (2, 0, 1)).reshape(img_channels, 9 * hidden)
        self.w2t = self.w2t.astype(jnp.bfloat16)
        self.b2col = 0.01 * jax.random.normal(
            k5, (img_channels, 1), jnp.float32)

    # ------------------------------------------------------------------ #
    def _fused_loss_partials(self, sa, soma, x, noise, cond, bt1, masks, W):
        B, C, HW = x.shape
        Cc = cond.shape[1]
        hidden = self.hidden
        kernel = functools.partial(_ddpm_fused_kernel, W=W, eps=1e-3)
        return pl.pallas_call(
            kernel,
            out_shape=jax.ShapeDtypeStruct((B, 1, HW), jnp.float32),
            grid=(B,),
            in_specs=[
                pl.BlockSpec(memory_space=pltpu.MemorySpace.SMEM),  # sa  (B,)
                pl.BlockSpec(memory_space=pltpu.MemorySpace.SMEM),  # soma(B,)
                pl.BlockSpec((1, C, HW), lambda i: (i, 0, 0)),      # x
                pl.BlockSpec((1, C, HW), lambda i: (i, 0, 0)),      # noise
                pl.BlockSpec((1, Cc, HW), lambda i: (i, 0, 0)),     # cond
                pl.BlockSpec((9, HW), lambda i: (0, 0)),            # masks
                pl.BlockSpec((hidden, 9 * (C + Cc)),
                             lambda i: (0, 0)),                     # w1t
                pl.BlockSpec((1, hidden, 1), lambda i: (i, 0, 0)),  # bias1+temb
                pl.BlockSpec((C, 9 * hidden), lambda i: (0, 0)),    # w2t
                pl.BlockSpec((C, 1), lambda i: (0, 0)),             # b2
            ],
            out_specs=pl.BlockSpec((1, 1, HW), lambda i: (i, 0, 0)),
            compiler_params=pltpu.CompilerParams(
                dimension_semantics=("parallel",)),
        )(sa, soma, x, noise, cond, masks, self.w1t, bt1, self.w2t, self.b2col)

    # ------------------------------------------------------------------ #
    def forward(self, x_nchw, cond_nchw, key):
        B, C, H, W = x_nchw.shape
        HW = H * W
        if HW % 128 != 0:
            raise ValueError("H*W must be a multiple of 128 (lane-dense layout)")

        k_t, k_noise = jax.random.split(key)
        # t ~ randint(0, T, (B,)) ; noise ~ randn_like(x)
        t = jax.random.randint(k_t, (B,), 0, self.num_timesteps)
        noise = jax.random.normal(k_noise, (B, C, HW), jnp.float32)

        # NCHW -> (B, C, H*W): pure metadata reshape, channels-first kept
        x = x_nchw.reshape(B, C, HW).astype(jnp.float32)
        cond = cond_nchw.reshape(B, cond_nchw.shape[1], HW).astype(jnp.float32)

        # extract() = per-batch coefficient gather (glue, SMEM scalars)
        sa = self.sqrt_alphas_cumprod[t]
        soma = self.sqrt_one_minus_alphas_cumprod[t]

        # bias1 + timestep embedding, precombined per batch (glue)
        bt1 = (self.b1[None, :] + self.temb_table[t]).reshape(
            B, self.hidden, 1)

        masks = _tap_masks(H, W)

        partials = self._fused_loss_partials(
            sa, soma, x, noise, cond, bt1, masks, W)     # (B, 1, HW)

        n = float(B * C * HW)
        return jnp.sum(partials) / n


if __name__ == "__main__":
    key = jax.random.PRNGKey(0)
    k_param, k_x, k_cond, k_fwd = jax.random.split(key, 4)

    B, C, H, W = 2, 3, 16, 16  # DDPM operates on 3-channel images
    ddpm = DDPMPallas(num_timesteps=8, img_channels=3, cond_channels=3,
                      hidden=32, key=k_param)

    x = jax.random.normal(k_x, (B, C, H, W), jnp.float32)
    condition = jax.random.normal(k_cond, (B, C, H, W), jnp.float32)

    loss = ddpm.forward(x, condition, k_fwd)
    jax.block_until_ready(loss)
    if not bool(jnp.isfinite(loss)):
        raise RuntimeError("loss is not finite")
    print("KERNEL_OK")
</pallas_src>

<mosaic_0001>
module attributes {stable_mosaic.version = 11 : i64} {
  func.func @_ddpm_fused_kernel(%arg0: i32, %arg1: memref<2xf32, #tpu.memory_space<smem>>, %arg2: memref<2xf32, #tpu.memory_space<smem>>, %arg3: memref<1x3x256xf32, #tpu.memory_space<vmem>>, %arg4: memref<1x3x256xf32, #tpu.memory_space<vmem>>, %arg5: memref<1x3x256xf32, #tpu.memory_space<vmem>>, %arg6: memref<9x256xbf16, #tpu.memory_space<vmem>>, %arg7: memref<32x54xbf16, #tpu.memory_space<vmem>>, %arg8: memref<1x32x1xf32, #tpu.memory_space<vmem>>, %arg9: memref<3x288xbf16, #tpu.memory_space<vmem>>, %arg10: memref<3x1xf32, #tpu.memory_space<vmem>>, %arg11: memref<1x1x256xf32, #tpu.memory_space<vmem>>) attributes {dimension_semantics = [#tpu.dimension_semantics<parallel>], iteration_bounds = array<i64: 2>, scalar_prefetch = 0 : i64, scratch_operands = 0 : i64, tpu.core_type = #tpu.core_type<tc>, window_params = [{transform_indices = @transform_0, window_bounds = array<i64: 2>}, {transform_indices = @transform_1, window_bounds = array<i64: 2>}, {transform_indices = @transform_2, window_bounds = array<i64: 1, 3, 256>}, {transform_indices = @transform_3, window_bounds = array<i64: 1, 3, 256>}, {transform_indices = @transform_4, window_bounds = array<i64: 1, 3, 256>}, {pipeline_mode = #tpu.pipeline_mode<synchronous>, transform_indices = @transform_5, window_bounds = array<i64: 9, 256>}, {pipeline_mode = #tpu.pipeline_mode<synchronous>, transform_indices = @transform_6, window_bounds = array<i64: 32, 54>}, {transform_indices = @transform_7, window_bounds = array<i64: 1, 32, 1>}, {pipeline_mode = #tpu.pipeline_mode<synchronous>, transform_indices = @transform_8, window_bounds = array<i64: 3, 288>}, {pipeline_mode = #tpu.pipeline_mode<synchronous>, transform_indices = @transform_9, window_bounds = array<i64: 3, 1>}, {transform_indices = @transform_10, window_bounds = array<i64: 1, 1, 256>}]} {
    %0 = arith.index_cast %arg0 : i32 to index
    %1 = memref.load %arg1[%0] : memref<2xf32, #tpu.memory_space<smem>>
    %2 = arith.index_cast %arg0 : i32 to index
    %3 = memref.load %arg2[%2] : memref<2xf32, #tpu.memory_space<smem>>
    %c0 = arith.constant 0 : index
    %c0_0 = arith.constant 0 : index
    %c0_1 = arith.constant 0 : index
    %4 = vector.load %arg3[%c0, %c0_0, %c0_1] : memref<1x3x256xf32, #tpu.memory_space<vmem>>, vector<1x3x256xf32>
    %5 = vector.shape_cast %4 : vector<1x3x256xf32> to vector<3x256xf32>
    %c0_2 = arith.constant 0 : index
    %c0_3 = arith.constant 0 : index
    %c0_4 = arith.constant 0 : index
    %6 = vector.load %arg4[%c0_2, %c0_3, %c0_4] : memref<1x3x256xf32, #tpu.memory_space<vmem>>, vector<1x3x256xf32>
    %7 = vector.shape_cast %6 : vector<1x3x256xf32> to vector<3x256xf32>
    %c0_5 = arith.constant 0 : index
    %c0_6 = arith.constant 0 : index
    %c0_7 = arith.constant 0 : index
    %8 = vector.load %arg5[%c0_5, %c0_6, %c0_7] : memref<1x3x256xf32, #tpu.memory_space<vmem>>, vector<1x3x256xf32>
    %9 = vector.shape_cast %8 : vector<1x3x256xf32> to vector<3x256xf32>
    %c0_8 = arith.constant 0 : index
    %c0_9 = arith.constant 0 : index
    %10 = vector.load %arg6[%c0_8, %c0_9] : memref<9x256xbf16, #tpu.memory_space<vmem>>, vector<9x256xbf16>
    %11 = vector.broadcast %1 : f32 to vector<3x256xf32>
    %12 = arith.mulf %11, %5 : vector<3x256xf32>
    %13 = vector.broadcast %3 : f32 to vector<3x256xf32>
    %14 = arith.mulf %13, %7 : vector<3x256xf32>
    %15 = arith.addf %12, %14 : vector<3x256xf32>
    %16 = arith.truncf %15 : vector<3x256xf32> to vector<3x256xbf16>
    %17 = arith.truncf %9 : vector<3x256xf32> to vector<3x256xbf16>
    %18 = tpu.concatenate %16, %17 in 0 : vector<3x256xbf16>, vector<3x256xbf16> -> vector<6x256xbf16>
    %cst = arith.constant 0.000000e+00 : bf16
    %19 = vector.broadcast %cst : bf16 to vector<6x17xbf16>
    %20 = vector.extract_strided_slice %18 {offsets = [0, 0], sizes = [6, 239], strides = [1, 1]} : vector<6x256xbf16> to vector<6x239xbf16>
    %21 = tpu.concatenate %19, %20 in 1 : vector<6x17xbf16>, vector<6x239xbf16> -> vector<6x256xbf16>
    %22 = vector.extract_strided_slice %10 {offsets = [0, 0], sizes = [1, 256], strides = [1, 1]} : vector<9x256xbf16> to vector<1x256xbf16>
    %23 = vector.broadcast %22 : vector<1x256xbf16> to vector<6x256xbf16>
    %24 = arith.mulf %21, %23 : vector<6x256xbf16>
    %cst_10 = arith.constant 0.000000e+00 : bf16
    %25 = vector.broadcast %cst_10 : bf16 to vector<6x16xbf16>
    %26 = vector.extract_strided_slice %18 {offsets = [0, 0], sizes = [6, 240], strides = [1, 1]} : vector<6x256xbf16> to vector<6x240xbf16>
    %27 = tpu.concatenate %25, %26 in 1 : vector<6x16xbf16>, vector<6x240xbf16> -> vector<6x256xbf16>
    %28 = vector.extract_strided_slice %10 {offsets = [1, 0], sizes = [1, 256], strides = [1, 1]} : vector<9x256xbf16> to vector<1x256xbf16>
    %29 = vector.broadcast %28 : vector<1x256xbf16> to vector<6x256xbf16>
    %30 = arith.mulf %27, %29 : vector<6x256xbf16>
    %cst_11 = arith.constant 0.000000e+00 : bf16
    %31 = vector.broadcast %cst_11 : bf16 to vector<6x15xbf16>
    %32 = vector.extract_strided_slice %18 {offsets = [0, 0], sizes = [6, 241], strides = [1, 1]} : vector<6x256xbf16> to vector<6x241xbf16>
    %33 = tpu.concatenate %31, %32 in 1 : vector<6x15xbf16>, vector<6x241xbf16> -> vector<6x256xbf16>
    %34 = vector.extract_strided_slice %10 {offsets = [2, 0], sizes = [1, 256], strides = [1, 1]} : vector<9x256xbf16> to vector<1x256xbf16>
    %35 = vector.broadcast %34 : vector<1x256xbf16> to vector<6x256xbf16>
    %36 = arith.mulf %33, %35 : vector<6x256xbf16>
    %cst_12 = arith.constant 0.000000e+00 : bf16
    %37 = vector.broadcast %cst_12 : bf16 to vector<6x1xbf16>
    %38 = vector.extract_strided_slice %18 {offsets = [0, 0], sizes = [6, 255], strides = [1, 1]} : vector<6x256xbf16> to vector<6x255xbf16>
    %39 = tpu.concatenate %37, %38 in 1 : vector<6x1xbf16>, vector<6x255xbf16> -> vector<6x256xbf16>
    %40 = vector.extract_strided_slice %10 {offsets = [3, 0], sizes = [1, 256], strides = [1, 1]} : vector<9x256xbf16> to vector<1x256xbf16>
    %41 = vector.broadcast %40 : vector<1x256xbf16> to vector<6x256xbf16>
    %42 = arith.mulf %39, %41 : vector<6x256xbf16>
    %43 = vector.extract_strided_slice %10 {offsets = [4, 0], sizes = [1, 256], strides = [1, 1]} : vector<9x256xbf16> to vector<1x256xbf16>
    %44 = vector.broadcast %43 : vector<1x256xbf16> to vector<6x256xbf16>
    %45 = arith.mulf %18, %44 : vector<6x256xbf16>
    %46 = vector.extract_strided_slice %18 {offsets = [0, 1], sizes = [6, 255], strides = [1, 1]} : vector<6x256xbf16> to vector<6x255xbf16>
    %cst_13 = arith.constant 0.000000e+00 : bf16
    %47 = vector.broadcast %cst_13 : bf16 to vector<6x1xbf16>
    %48 = tpu.concatenate %46, %47 in 1 : vector<6x255xbf16>, vector<6x1xbf16> -> vector<6x256xbf16>
    %49 = vector.extract_strided_slice %10 {offsets = [5, 0], sizes = [1, 256], strides = [1, 1]} : vector<9x256xbf16> to vector<1x256xbf16>
    %50 = vector.broadcast %49 : vector<1x256xbf16> to vector<6x256xbf16>
    %51 = arith.mulf %48, %50 : vector<6x256xbf16>
    %52 = vector.extract_strided_slice %18 {offsets = [0, 15], sizes = [6, 241], strides = [1, 1]} : vector<6x256xbf16> to vector<6x241xbf16>
    %cst_14 = arith.constant 0.000000e+00 : bf16
    %53 = vector.broadcast %cst_14 : bf16 to vector<6x15xbf16>
    %54 = tpu.concatenate %52, %53 in 1 : vector<6x241xbf16>, vector<6x15xbf16> -> vector<6x256xbf16>
    %55 = vector.extract_strided_slice %10 {offsets = [6, 0], sizes = [1, 256], strides = [1, 1]} : vector<9x256xbf16> to vector<1x256xbf16>
    %56 = vector.broadcast %55 : vector<1x256xbf16> to vector<6x256xbf16>
    %57 = arith.mulf %54, %56 : vector<6x256xbf16>
    %58 = vector.extract_strided_slice %18 {offsets = [0, 16], sizes = [6, 240], strides = [1, 1]} : vector<6x256xbf16> to vector<6x240xbf16>
    %cst_15 = arith.constant 0.000000e+00 : bf16
    %59 = vector.broadcast %cst_15 : bf16 to vector<6x16xbf16>
    %60 = tpu.concatenate %58, %59 in 1 : vector<6x240xbf16>, vector<6x16xbf16> -> vector<6x256xbf16>
    %61 = vector.extract_strided_slice %10 {offsets = [7, 0], sizes = [1, 256], strides = [1, 1]} : vector<9x256xbf16> to vector<1x256xbf16>
    %62 = vector.broadcast %61 : vector<1x256xbf16> to vector<6x256xbf16>
    %63 = arith.mulf %60, %62 : vector<6x256xbf16>
    %64 = vector.extract_strided_slice %18 {offsets = [0, 17], sizes = [6, 239], strides = [1, 1]} : vector<6x256xbf16> to vector<6x239xbf16>
    %cst_16 = arith.constant 0.000000e+00 : bf16
    %65 = vector.broadcast %cst_16 : bf16 to vector<6x17xbf16>
    %66 = tpu.concatenate %64, %65 in 1 : vector<6x239xbf16>, vector<6x17xbf16> -> vector<6x256xbf16>
    %67 = vector.extract_strided_slice %10 {offsets = [8, 0], sizes = [1, 256], strides = [1, 1]} : vector<9x256xbf16> to vector<1x256xbf16>
    %68 = vector.broadcast %67 : vector<1x256xbf16> to vector<6x256xbf16>
    %69 = arith.mulf %66, %68 : vector<6x256xbf16>
    %70 = tpu.concatenate %24, %30, %36, %42, %45, %51, %57, %63, %69 in 0 : vector<6x256xbf16>, vector<6x256xbf16>, vector<6x256xbf16>, vector<6x256xbf16>, vector<6x256xbf16>, vector<6x256xbf16>, vector<6x256xbf16>, vector<6x256xbf16>, vector<6x256xbf16> -> vector<54x256xbf16>
    %c0_17 = arith.constant 0 : index
    %c0_18 = arith.constant 0 : index
    %71 = vector.load %arg7[%c0_17, %c0_18] : memref<32x54xbf16, #tpu.memory_space<vmem>>, vector<32x54xbf16>
    %cst_19 = arith.constant dense<0.000000e+00> : vector<32x256xf32>
    %72 = tpu.matmul %71, %70, %cst_19 {dimension_numbers = #tpu.dot_dimension_numbers<[1], [0], [0], [1], [0, 0, 1, 1], [], []>} : vector<32x54xbf16>, vector<54x256xbf16>, vector<32x256xf32> -> vector<32x256xf32>
    %c0_20 = arith.constant 0 : index
    %c0_21 = arith.constant 0 : index
    %c0_22 = arith.constant 0 : index
    %73 = vector.load %arg8[%c0_20, %c0_21, %c0_22] : memref<1x32x1xf32, #tpu.memory_space<vmem>>, vector<1x32x1xf32>
    %74 = vector.shape_cast %73 : vector<1x32x1xf32> to vector<32x1xf32>
    %75 = vector.broadcast %74 : vector<32x1xf32> to vector<32x256xf32>
    %76 = arith.addf %72, %75 : vector<32x256xf32>
    %cst_23 = arith.constant 0.000000e+00 : f32
    %77 = vector.broadcast %cst_23 : f32 to vector<32x256xf32>
    %78 = arith.maximumf %76, %77 : vector<32x256xf32>
    %79 = arith.truncf %78 : vector<32x256xf32> to vector<32x256xbf16>
    %cst_24 = arith.constant 0.000000e+00 : bf16
    %80 = vector.broadcast %cst_24 : bf16 to vector<32x17xbf16>
    %81 = vector.extract_strided_slice %79 {offsets = [0, 0], sizes = [32, 239], strides = [1, 1]} : vector<32x256xbf16> to vector<32x239xbf16>
    %82 = tpu.concatenate %80, %81 in 1 : vector<32x17xbf16>, vector<32x239xbf16> -> vector<32x256xbf16>
    %83 = vector.extract_strided_slice %10 {offsets = [0, 0], sizes = [1, 256], strides = [1, 1]} : vector<9x256xbf16> to vector<1x256xbf16>
    %84 = vector.broadcast %83 : vector<1x256xbf16> to vector<32x256xbf16>
    %85 = arith.mulf %82, %84 : vector<32x256xbf16>
    %cst_25 = arith.constant 0.000000e+00 : bf16
    %86 = vector.broadcast %cst_25 : bf16 to vector<32x16xbf16>
    %87 = vector.extract_strided_slice %79 {offsets = [0, 0], sizes = [32, 240], strides = [1, 1]} : vector<32x256xbf16> to vector<32x240xbf16>
    %88 = tpu.concatenate %86, %87 in 1 : vector<32x16xbf16>, vector<32x240xbf16> -> vector<32x256xbf16>
    %89 = vector.extract_strided_slice %10 {offsets = [1, 0], sizes = [1, 256], strides = [1, 1]} : vector<9x256xbf16> to vector<1x256xbf16>
    %90 = vector.broadcast %89 : vector<1x256xbf16> to vector<32x256xbf16>
    %91 = arith.mulf %88, %90 : vector<32x256xbf16>
    %cst_26 = arith.constant 0.000000e+00 : bf16
    %92 = vector.broadcast %cst_26 : bf16 to vector<32x15xbf16>
    %93 = vector.extract_strided_slice %79 {offsets = [0, 0], sizes = [32, 241], strides = [1, 1]} : vector<32x256xbf16> to vector<32x241xbf16>
    %94 = tpu.concatenate %92, %93 in 1 : vector<32x15xbf16>, vector<32x241xbf16> -> vector<32x256xbf16>
    %95 = vector.extract_strided_slice %10 {offsets = [2, 0], sizes = [1, 256], strides = [1, 1]} : vector<9x256xbf16> to vector<1x256xbf16>
    %96 = vector.broadcast %95 : vector<1x256xbf16> to vector<32x256xbf16>
    %97 = arith.mulf %94, %96 : vector<32x256xbf16>
    %cst_27 = arith.constant 0.000000e+00 : bf16
    %98 = vector.broadcast %cst_27 : bf16 to vector<32x1xbf16>
    %99 = vector.extract_strided_slice %79 {offsets = [0, 0], sizes = [32, 255], strides = [1, 1]} : vector<32x256xbf16> to vector<32x255xbf16>
    %100 = tpu.concatenate %98, %99 in 1 : vector<32x1xbf16>, vector<32x255xbf16> -> vector<32x256xbf16>
    %101 = vector.extract_strided_slice %10 {offsets = [3, 0], sizes = [1, 256], strides = [1, 1]} : vector<9x256xbf16> to vector<1x256xbf16>
    %102 = vector.broadcast %101 : vector<1x256xbf16> to vector<32x256xbf16>
    %103 = arith.mulf %100, %102 : vector<32x256xbf16>
    %104 = vector.extract_strided_slice %10 {offsets = [4, 0], sizes = [1, 256], strides = [1, 1]} : vector<9x256xbf16> to vector<1x256xbf16>
    %105 = vector.broadcast %104 : vector<1x256xbf16> to vector<32x256xbf16>
    %106 = arith.mulf %79, %105 : vector<32x256xbf16>
    %107 = vector.extract_strided_slice %79 {offsets = [0, 1], sizes = [32, 255], strides = [1, 1]} : vector<32x256xbf16> to vector<32x255xbf16>
    %cst_28 = arith.constant 0.000000e+00 : bf16
    %108 = vector.broadcast %cst_28 : bf16 to vector<32x1xbf16>
    %109 = tpu.concatenate %107, %108 in 1 : vector<32x255xbf16>, vector<32x1xbf16> -> vector<32x256xbf16>
    %110 = vector.extract_strided_slice %10 {offsets = [5, 0], sizes = [1, 256], strides = [1, 1]} : vector<9x256xbf16> to vector<1x256xbf16>
    %111 = vector.broadcast %110 : vector<1x256xbf16> to vector<32x256xbf16>
    %112 = arith.mulf %109, %111 : vector<32x256xbf16>
    %113 = vector.extract_strided_slice %79 {offsets = [0, 15], sizes = [32, 241], strides = [1, 1]} : vector<32x256xbf16> to vector<32x241xbf16>
    %cst_29 = arith.constant 0.000000e+00 : bf16
    %114 = vector.broadcast %cst_29 : bf16 to vector<32x15xbf16>
    %115 = tpu.concatenate %113, %114 in 1 : vector<32x241xbf16>, vector<32x15xbf16> -> vector<32x256xbf16>
    %116 = vector.extract_strided_slice %10 {offsets = [6, 0], sizes = [1, 256], strides = [1, 1]} : vector<9x256xbf16> to vector<1x256xbf16>
    %117 = vector.broadcast %116 : vector<1x256xbf16> to vector<32x256xbf16>
    %118 = arith.mulf %115, %117 : vector<32x256xbf16>
    %119 = vector.extract_strided_slice %79 {offsets = [0, 16], sizes = [32, 240], strides = [1, 1]} : vector<32x256xbf16> to vector<32x240xbf16>
    %cst_30 = arith.constant 0.000000e+00 : bf16
    %120 = vector.broadcast %cst_30 : bf16 to vector<32x16xbf16>
    %121 = tpu.concatenate %119, %120 in 1 : vector<32x240xbf16>, vector<32x16xbf16> -> vector<32x256xbf16>
    %122 = vector.extract_strided_slice %10 {offsets = [7, 0], sizes = [1, 256], strides = [1, 1]} : vector<9x256xbf16> to vector<1x256xbf16>
    %123 = vector.broadcast %122 : vector<1x256xbf16> to vector<32x256xbf16>
    %124 = arith.mulf %121, %123 : vector<32x256xbf16>
    %125 = vector.extract_strided_slice %79 {offsets = [0, 17], sizes = [32, 239], strides = [1, 1]} : vector<32x256xbf16> to vector<32x239xbf16>
    %cst_31 = arith.constant 0.000000e+00 : bf16
    %126 = vector.broadcast %cst_31 : bf16 to vector<32x17xbf16>
    %127 = tpu.concatenate %125, %126 in 1 : vector<32x239xbf16>, vector<32x17xbf16> -> vector<32x256xbf16>
    %128 = vector.extract_strided_slice %10 {offsets = [8, 0], sizes = [1, 256], strides = [1, 1]} : vector<9x256xbf16> to vector<1x256xbf16>
    %129 = vector.broadcast %128 : vector<1x256xbf16> to vector<32x256xbf16>
    %130 = arith.mulf %127, %129 : vector<32x256xbf16>
    %131 = tpu.concatenate %85, %91, %97, %103, %106, %112, %118, %124, %130 in 0 : vector<32x256xbf16>, vector<32x256xbf16>, vector<32x256xbf16>, vector<32x256xbf16>, vector<32x256xbf16>, vector<32x256xbf16>, vector<32x256xbf16>, vector<32x256xbf16>, vector<32x256xbf16> -> vector<288x256xbf16>
    %c0_32 = arith.constant 0 : index
    %c0_33 = arith.constant 0 : index
    %132 = vector.load %arg9[%c0_32, %c0_33] : memref<3x288xbf16, #tpu.memory_space<vmem>>, vector<3x288xbf16>
    %cst_34 = arith.constant dense<0.000000e+00> : vector<3x256xf32>
    %133 = tpu.matmul %132, %131, %cst_34 {dimension_numbers = #tpu.dot_dimension_numbers<[1], [0], [0], [1], [0, 0, 1, 1], [], []>} : vector<3x288xbf16>, vector<288x256xbf16>, vector<3x256xf32> -> vector<3x256xf32>
    %c0_35 = arith.constant 0 : index
    %c0_36 = arith.constant 0 : index
    %134 = vector.load %arg10[%c0_35, %c0_36] : memref<3x1xf32, #tpu.memory_space<vmem>>, vector<3x1xf32>
    %135 = vector.broadcast %134 : vector<3x1xf32> to vector<3x256xf32>
    %136 = arith.addf %133, %135 : vector<3x256xf32>
    %137 = arith.subf %136, %7 : vector<3x256xf32>
    %138 = arith.mulf %137, %137 : vector<3x256xf32>
    %cst_37 = arith.constant 9.99999997E-7 : f32
    %139 = vector.broadcast %cst_37 : f32 to vector<3x256xf32>
    %140 = arith.addf %138, %139 : vector<3x256xf32>
    %141 = math.sqrt %140 : vector<3x256xf32>
    %cst_38 = arith.constant dense<0.000000e+00> : vector<256xf32>
    %142 = vector.multi_reduction <add>, %141, %cst_38 [0] : vector<3x256xf32> to vector<256xf32>
    %143 = vector.shape_cast %142 : vector<256xf32> to vector<1x256xf32>
    %c0_39 = arith.constant 0 : index
    %c0_40 = arith.constant 0 : index
    %c0_41 = arith.constant 0 : index
    %144 = vector.load %arg11[%c0_39, %c0_40, %c0_41] : memref<1x1x256xf32, #tpu.memory_space<vmem>>, vector<1x1x256xf32>
    %145 = vector.shape_cast %144 : vector<1x1x256xf32> to vector<1x256xf32>
    %146 = vector.shape_cast %143 : vector<1x256xf32> to vector<1x1x256xf32>
    tpu.vector_store %arg11[%c0_39, %c0_40, %c0_41], %146 {strides = array<i32>} : memref<1x1x256xf32, #tpu.memory_space<vmem>>, vector<1x1x256xf32>,
    return
  }
  func.func @transform_0(%arg0: i32) -> i32 {
    %c0_i32 = arith.constant 0 : i32
    %c0_i32_0 = arith.constant 0 : i32
    return %c0_i32 : i32
  }
  func.func @transform_1(%arg0: i32) -> i32 {
    %c0_i32 = arith.constant 0 : i32
    %c0_i32_0 = arith.constant 0 : i32
    return %c0_i32 : i32
  }
  func.func @transform_2(%arg0: i32) -> (i32, i32, i32) {
    %c0_i32 = arith.constant 0 : i32
    %c0_i32_0 = arith.constant 0 : i32
    %c0_i32_1 = arith.constant 0 : i32
    return %arg0, %c0_i32, %c0_i32_0 : i32, i32, i32
  }
  func.func @transform_3(%arg0: i32) -> (i32, i32, i32) {
    %c0_i32 = arith.constant 0 : i32
    %c0_i32_0 = arith.constant 0 : i32
    %c0_i32_1 = arith.constant 0 : i32
    return %arg0, %c0_i32, %c0_i32_0 : i32, i32, i32
  }
  func.func @transform_4(%arg0: i32) -> (i32, i32, i32) {
    %c0_i32 = arith.constant 0 : i32
    %c0_i32_0 = arith.constant 0 : i32
    %c0_i32_1 = arith.constant 0 : i32
    return %arg0, %c0_i32, %c0_i32_0 : i32, i32, i32
  }
  func.func @transform_5(%arg0: i32) -> (i32, i32) {
    %c0_i32 = arith.constant 0 : i32
    %c0_i32_0 = arith.constant 0 : i32
    %c0_i32_1 = arith.constant 0 : i32
    return %c0_i32, %c0_i32_0 : i32, i32
  }
  func.func @transform_6(%arg0: i32) -> (i32, i32) {
    %c0_i32 = arith.constant 0 : i32
    %c0_i32_0 = arith.constant 0 : i32
    %c0_i32_1 = arith.constant 0 : i32
    return %c0_i32, %c0_i32_0 : i32, i32
  }
  func.func @transform_7(%arg0: i32) -> (i32, i32, i32) {
    %c0_i32 = arith.constant 0 : i32
    %c0_i32_0 = arith.constant 0 : i32
    %c0_i32_1 = arith.constant 0 : i32
    return %arg0, %c0_i32, %c0_i32_0 : i32, i32, i32
  }
  func.func @transform_8(%arg0: i32) -> (i32, i32) {
    %c0_i32 = arith.constant 0 : i32
    %c0_i32_0 = arith.constant 0 : i32
    %c0_i32_1 = arith.constant 0 : i32
    return %c0_i32, %c0_i32_0 : i32, i32
  }
  func.func @transform_9(%arg0: i32) -> (i32, i32) {
    %c0_i32 = arith.constant 0 : i32
    %c0_i32_0 = arith.constant 0 : i32
    %c0_i32_1 = arith.constant 0 : i32
    return %c0_i32, %c0_i32_0 : i32, i32
  }
  func.func @transform_10(%arg0: i32) -> (i32, i32, i32) {
    %c0_i32 = arith.constant 0 : i32
    %c0_i32_0 = arith.constant 0 : i32
    %c0_i32_1 = arith.constant 0 : i32
    return %arg0, %c0_i32, %c0_i32_0 : i32, i32, i32
  }
}

</mosaic_0001>

<llo_original>
// kernel: tpu_custom_call.1
$region0: #{tpu_custom_call.1}
  #allocation0 [shape = 'u32[]', space=smem, size = 0x4, offset = 0x4, fixed_abs, tag = 'smem constant byte address 0x4 - core index']
  #allocation1 [shape = 'u32[144,128]{1,0:T(1,128)}', space=vmem, size = 0x12000, scoped, tag = 'internal scratch']
  %s0 = inlined_call_operand.vmem [shape: f32[2], index: 0, kind: input, shape index: {}]
  %s1 = inlined_call_operand.vmem [shape: f32[2], index: 1, kind: input, shape index: {}]
  %s2 = inlined_call_operand.vmem [shape: f32[2,3,256], index: 2, kind: input, shape index: {}]
  %s3 = inlined_call_operand.vmem [shape: f32[2,3,256], index: 3, kind: input, shape index: {}]
  %s4 = inlined_call_operand.vmem [shape: f32[2,3,256], index: 4, kind: input, shape index: {}]
  %s5 = inlined_call_operand.vmem [shape: bf16[9,256], index: 5, kind: input, shape index: {}]
  %s6 = inlined_call_operand.vmem [shape: bf16[32,54], index: 6, kind: input, shape index: {}]
  %s7 = inlined_call_operand.vmem [shape: f32[2,32,1], index: 7, kind: input, shape index: {}]
  %s8 = inlined_call_operand.vmem [shape: bf16[3,288], index: 8, kind: input, shape index: {}]
  %s9 = inlined_call_operand.vmem [shape: f32[3,1], index: 9, kind: input, shape index: {}]
  %s10 = inlined_call_operand.hbm [shape: f32[2,1,256], index: 10, kind: output, shape index: {}]
  %s11 = sld [smem:[#allocation0]]
  $region81: #{tpu_custom_call.1} parent=0
    _
  %s13 = ssub.s32 1, %s11
  %s14 = scalar_select 0, %s13, %s11
  $region1: #{tpu_custom_call.1} parent=0
    #allocation2 [shape = 'u8[512]{0}', space=smem, size = 0x200, scoped, tag = 'input window, operand 0, single buffered']
    #allocation3 [shape = 's32[2]{0}', space=sflag, size = 0x8, scoped, tag = 'scoped memory for tpu_custom_call.1']
    #allocation4 [shape = 's32[2]{0}', space=sflag, size = 0x8, scoped, tag = 'scoped memory for tpu_custom_call.1']
    #allocation5 [shape = 'u8[512]{0}', space=smem, size = 0x200, scoped, tag = 'input window, operand 1, single buffered']
    #allocation6 [shape = 's32[1]{0}', space=sflag, size = 0x4, scoped, tag = 'scoped memory for tpu_custom_call.1']
    #allocation7 [shape = 'u8[2048]{0}', space=vmem, size = 0x800, scoped, tag = 'output window, operand 0']
    %15 = vsyncpa [#allocation4], 0
    %16 = vsyncpa [#allocation6], 0
    %17 = vsyncpa [#allocation3], 0
    %s18 = scalar_lea.sflag [#allocation3], 1
    %19 = vsyncpa %s18, 0
    loop: start=0, step=1, limit=4
    $region2: #{tpu_custom_call.1} parent=1 // loop_pre_header
      _
    $region3: #{tpu_custom_call.1} parent=1 // loop_header
      %s21 = sphi 0, %s25
      %p22 = scmp.ge.s32.totalorder %s21, 4
      %s29 = sphi 0, %s29
      %s31 = sphi 0, %s29
      %s32 = sphi 0, %s31
      %s46 = sphi 0, %s32
      %s50 = sphi 0, %s50
      %s52 = sphi 0, %s50
      %s53 = sphi 0, %s52
      %s67 = sphi 0, %s53
      %s73 = sphi 0, %s75
      %s76 = sphi 0, %s73
      %s77 = sphi 0, %s76
      %s93 = sphi 0, %s77
      %s99 = sphi 0, %s101
      %s102 = sphi 0, %s99
      %s103 = sphi 0, %s102
      %s119 = sphi 0, %s103
      %s125 = sphi 0, %s127
      %s128 = sphi 0, %s125
      %s129 = sphi 0, %s128
      %s145 = sphi 0, %s129
      %s149 = sphi 0, %s149
      %s151 = sphi 0, %s149
      %s152 = sphi 0, %s151
      %s166 = sphi 0, %s152
      %s170 = sphi 0, %s170
      %s172 = sphi 0, %s170
      %s173 = sphi 0, %s172
      %s187 = sphi 0, %s173
      %s193 = sphi 0, %s195
      %s196 = sphi 0, %s193
      %s197 = sphi 0, %s196
      %s213 = sphi 0, %s197
      %s217 = sphi 0, %s217
      %s219 = sphi 0, %s217
      %s220 = sphi 0, %s219
      %s234 = sphi 0, %s220
      %s238 = sphi 0, %s238
      %s240 = sphi 0, %s238
      %s241 = sphi 0, %s240
      %s255 = sphi 0, %s241
      %s261 = sphi 0, %s263
      %s264 = sphi 0, %s261
      %s265 = sphi 0, %s264
      %s281 = sphi 0, %s265
    $region4: #{tpu_custom_call.1} parent=1 // loop_header_branch
      %24 = sbr.rel (%p22) target = $region8
    $region5: #{tpu_custom_call.1} parent=1 // loop_body
      %s26 = ssub.s32 %s21, 1
      %s27 = ssub.s32 %s21, 2
      %s28 = sadd.s32 %s21, 1
      %s30 = sadd.s32 %s29, 1
      %p33 = scmp.eq.s32.totalorder %s21, 1
      %p34 = scmp.ne.s32.totalorder %s29, %s31
      %p35 = scmp.eq.s32.totalorder %s21, 0
      %p36 = por %p34, %p35
      %p37 = scmp.ne.s32.totalorder %s29, %s31
      %p38 = scmp.eq.s32.totalorder %s26, 1
      %p39 = por %p37, %p38
      %p40 = scmp.ne.s32.totalorder %s31, %s32
      %p41 = scmp.eq.s32.totalorder %s26, 0
      %p42 = por %p40, %p41
      %p43 = scmp.ne.s32.totalorder %s31, %s32
      %p44 = scmp.eq.s32.totalorder %s27, 1
      %p45 = por %p43, %p44
      %p47 = scmp.ne.s32.totalorder %s32, %s46
      %p48 = scmp.eq.s32.totalorder %s27, 0
      %p49 = por %p47, %p48
      %s51 = sadd.s32 %s50, 1
      %p54 = scmp.eq.s32.totalorder %s21, 1
      %p55 = scmp.ne.s32.totalorder %s50, %s52
      %p56 = scmp.eq.s32.totalorder %s21, 0
      %p57 = por %p55, %p56
      %p58 = scmp.ne.s32.totalorder %s50, %s52
      %p59 = scmp.eq.s32.totalorder %s26, 1
      %p60 = por %p58, %p59
      %p61 = scmp.ne.s32.totalorder %s52, %s53
      %p62 = scmp.eq.s32.totalorder %s26, 0
      %p63 = por %p61, %p62
      %p64 = scmp.ne.s32.totalorder %s52, %s53
      %p65 = scmp.eq.s32.totalorder %s27, 1
      %p66 = por %p64, %p65
      %p68 = scmp.ne.s32.totalorder %s53, %s67
      %p69 = scmp.eq.s32.totalorder %s27, 0
      %p70 = por %p68, %p69
      %s71 = ssub.s32 %s21, %s28
      %p72 = scmp.eq.s32.totalorder %s71, 0
      %s74 = sadd.s32 %s73, 1
      %s75 = scalar_select %p72, %s73, %s74
      %p78 = pneg %p72
      %p79 = scmp.eq.s32.totalorder %s21, 1
      %p80 = por %p78, %p79
      %p81 = scmp.ne.s32.totalorder %s73, %s76
      %p82 = scmp.eq.s32.totalorder %s21, 0
      %p83 = por %p81, %p82
      %p84 = scmp.ne.s32.totalorder %s73, %s76
      %p85 = scmp.eq.s32.totalorder %s26, 1
      %p86 = por %p84, %p85
      %p87 = scmp.ne.s32.totalorder %s76, %s77
      %p88 = scmp.eq.s32.totalorder %s26, 0
      %p89 = por %p87, %p88
      %p90 = scmp.ne.s32.totalorder %s76, %s77
      %p91 = scmp.eq.s32.totalorder %s27, 1
      %p92 = por %p90, %p91
      %p94 = scmp.ne.s32.totalorder %s77, %s93
      %p95 = scmp.eq.s32.totalorder %s27, 0
      %p96 = por %p94, %p95
      %s97 = ssub.s32 %s21, %s28
      %p98 = scmp.eq.s32.totalorder %s97, 0
      %s100 = sadd.s32 %s99, 1
      %s101 = scalar_select %p98, %s99, %s100
      %p104 = pneg %p98
      %p105 = scmp.eq.s32.totalorder %s21, 1
      %p106 = por %p104, %p105
      %p107 = scmp.ne.s32.totalorder %s99, %s102
      %p108 = scmp.eq.s32.totalorder %s21, 0
      %p109 = por %p107, %p108
      %p110 = scmp.ne.s32.totalorder %s99, %s102
      %p111 = scmp.eq.s32.totalorder %s26, 1
      %p112 = por %p110, %p111
      %p113 = scmp.ne.s32.totalorder %s102, %s103
      %p114 = scmp.eq.s32.totalorder %s26, 0
      %p115 = por %p113, %p114
      %p116 = scmp.ne.s32.totalorder %s102, %s103
      %p117 = scmp.eq.s32.totalorder %s27, 1
      %p118 = por %p116, %p117
      %p120 = scmp.ne.s32.totalorder %s103, %s119
      %p121 = scmp.eq.s32.totalorder %s27, 0
      %p122 = por %p120, %p121
      %s123 = ssub.s32 %s21, %s28
      %p124 = scmp.eq.s32.totalorder %s123, 0
      %s126 = sadd.s32 %s125, 1
      %s127 = scalar_select %p124, %s125, %s126
      %p130 = pneg %p124
      %p131 = scmp.eq.s32.totalorder %s21, 1
      %p132 = por %p130, %p131
      %p133 = scmp.ne.s32.totalorder %s125, %s128
      %p134 = scmp.eq.s32.totalorder %s21, 0
      %p135 = por %p133, %p134
      %p136 = scmp.ne.s32.totalorder %s125, %s128
      %p137 = scmp.eq.s32.totalorder %s26, 1
      %p138 = por %p136, %p137
      %p139 = scmp.ne.s32.totalorder %s128, %s129
      %p140 = scmp.eq.s32.totalorder %s26, 0
      %p141 = por %p139, %p140
      %p142 = scmp.ne.s32.totalorder %s128, %s129
      %p143 = scmp.eq.s32.totalorder %s27, 1
      %p144 = por %p142, %p143
      %p146 = scmp.ne.s32.totalorder %s129, %s145
      %p147 = scmp.eq.s32.totalorder %s27, 0
      %p148 = por %p146, %p147
      %s150 = sadd.s32 %s149, 1
      %p153 = scmp.eq.s32.totalorder %s21, 1
      %p154 = scmp.ne.s32.totalorder %s149, %s151
      %p155 = scmp.eq.s32.totalorder %s21, 0
      %p156 = por %p154, %p155
      %p157 = scmp.ne.s32.totalorder %s149, %s151
      %p158 = scmp.eq.s32.totalorder %s26, 1
      %p159 = por %p157, %p158
      %p160 = scmp.ne.s32.totalorder %s151, %s152
      %p161 = scmp.eq.s32.totalorder %s26, 0
      %p162 = por %p160, %p161
      %p163 = scmp.ne.s32.totalorder %s151, %s152
      %p164 = scmp.eq.s32.totalorder %s27, 1
      %p165 = por %p163, %p164
      %p167 = scmp.ne.s32.totalorder %s152, %s166
      %p168 = scmp.eq.s32.totalorder %s27, 0
      %p169 = por %p167, %p168
      %s171 = sadd.s32 %s170, 1
      %p174 = scmp.eq.s32.totalorder %s21, 1
      %p175 = scmp.ne.s32.totalorder %s170, %s172
      %p176 = scmp.eq.s32.totalorder %s21, 0
      %p177 = por %p175, %p176
      %p178 = scmp.ne.s32.totalorder %s170, %s172
      %p179 = scmp.eq.s32.totalorder %s26, 1
      %p180 = por %p178, %p179
      %p181 = scmp.ne.s32.totalorder %s172, %s173
      %p182 = scmp.eq.s32.totalorder %s26, 0
      %p183 = por %p181, %p182
      %p184 = scmp.ne.s32.totalorder %s172, %s173
      %p185 = scmp.eq.s32.totalorder %s27, 1
      %p186 = por %p184, %p185
      %p188 = scmp.ne.s32.totalorder %s173, %s187
      %p189 = scmp.eq.s32.totalorder %s27, 0
      %p190 = por %p188, %p189
      %s191 = ssub.s32 %s21, %s28
      %p192 = scmp.eq.s32.totalorder %s191, 0
      %s194 = sadd.s32 %s193, 1
      %s195 = scalar_select %p192, %s193, %s194
      %p198 = pneg %p192
      %p199 = scmp.eq.s32.totalorder %s21, 1
      %p200 = por %p198, %p199
      %p201 = scmp.ne.s32.totalorder %s193, %s196
      %p202 = scmp.eq.s32.totalorder %s21, 0
      %p203 = por %p201, %p202
      %p204 = scmp.ne.s32.totalorder %s193, %s196
      %p205 = scmp.eq.s32.totalorder %s26, 1
      %p206 = por %p204, %p205
      %p207 = scmp.ne.s32.totalorder %s196, %s197
      %p208 = scmp.eq.s32.totalorder %s26, 0
      %p209 = por %p207, %p208
      %p210 = scmp.ne.s32.totalorder %s196, %s197
      %p211 = scmp.eq.s32.totalorder %s27, 1
      %p212 = por %p210, %p211
      %p214 = scmp.ne.s32.totalorder %s197, %s213
      %p215 = scmp.eq.s32.totalorder %s27, 0
      %p216 = por %p214, %p215
      %s218 = sadd.s32 %s217, 1
      %p221 = scmp.eq.s32.totalorder %s21, 1
      %p222 = scmp.ne.s32.totalorder %s217, %s219
      %p223 = scmp.eq.s32.totalorder %s21, 0
      %p224 = por %p222, %p223
      %p225 = scmp.ne.s32.totalorder %s217, %s219
      %p226 = scmp.eq.s32.totalorder %s26, 1
      %p227 = por %p225, %p226
      %p228 = scmp.ne.s32.totalorder %s219, %s220
      %p229 = scmp.eq.s32.totalorder %s26, 0
      %p230 = por %p228, %p229
      %p231 = scmp.ne.s32.totalorder %s219, %s220
      %p232 = scmp.eq.s32.totalorder %s27, 1
      %p233 = por %p231, %p232
      %p235 = scmp.ne.s32.totalorder %s220, %s234
      %p236 = scmp.eq.s32.totalorder %s27, 0
      %p237 = por %p235, %p236
      %s239 = sadd.s32 %s238, 1
      %p242 = scmp.eq.s32.totalorder %s21, 1
      %p243 = scmp.ne.s32.totalorder %s238, %s240
      %p244 = scmp.eq.s32.totalorder %s21, 0
      %p245 = por %p243, %p244
      %p246 = scmp.ne.s32.totalorder %s238, %s240
      %p247 = scmp.eq.s32.totalorder %s26, 1
      %p248 = por %p246, %p247
      %p249 = scmp.ne.s32.totalorder %s240, %s241
      %p250 = scmp.eq.s32.totalorder %s26, 0
      %p251 = por %p249, %p250
      %p252 = scmp.ne.s32.totalorder %s240, %s241
      %p253 = scmp.eq.s32.totalorder %s27, 1
      %p254 = por %p252, %p253
      %p256 = scmp.ne.s32.totalorder %s241, %s255
      %p257 = scmp.eq.s32.totalorder %s27, 0
      %p258 = por %p256, %p257
      %s259 = ssub.s32 %s21, %s28
      %p260 = scmp.eq.s32.totalorder %s259, 0
      %s262 = sadd.s32 %s261, 1
      %s263 = scalar_select %p260, %s261, %s262
      %p266 = pneg %p260
      %p267 = scmp.eq.s32.totalorder %s21, 1
      %p268 = por %p266, %p267
      %p269 = scmp.ne.s32.totalorder %s261, %s264
      %p270 = scmp.eq.s32.totalorder %s21, 0
      %p271 = por %p269, %p270
      %p272 = scmp.ne.s32.totalorder %s261, %s264
      %p273 = scmp.eq.s32.totalorder %s26, 1
      %p274 = por %p272, %p273
      %p275 = scmp.ne.s32.totalorder %s264, %s265
      %p276 = scmp.eq.s32.totalorder %s26, 0
      %p277 = por %p275, %p276
      %p278 = scmp.ne.s32.totalorder %s264, %s265
      %p279 = scmp.eq.s32.totalorder %s27, 1
      %p280 = por %p278, %p279
      %p282 = scmp.ne.s32.totalorder %s265, %s281
      %p283 = scmp.eq.s32.totalorder %s27, 0
      %p284 = por %p282, %p283
      %p285 = scmp.le.s32.totalorder 1, %s21
      %p286 = scmp.lt.s32.totalorder %s21, 3
      %p287 = pnand %p285, %p286
      %p288 = pneg %p287
      // Predicated region
      $region9: #{tpu_custom_call.1} parent=5 // pred_check
        _
      $region10: #{tpu_custom_call.1} parent=5 // pred_check_branch
        %290 = sbr.rel (%p287) target = $region12
      $region11: #{tpu_custom_call.1} parent=5 // pred_region
        %s291 = ssub.s32 %s21, 1
        // Predicated region
        $region13: #{tpu_custom_call.1} parent=11 // pred_check
          %p292 = pneg %p42
        $region14: #{tpu_custom_call.1} parent=11 // pred_check_branch
          %294 = sbr.rel (%p292) target = $region16
        $region15: #{tpu_custom_call.1} parent=11 // pred_region
          %s296 = ssub.s32 16, 16
          %297 = vsyncadd [#allocation4], %s296
          %s299 = sshll.u32 %s0, 4
          %s300 = int_to_ptr.vmem [resolvable:$true] %s299
          %302 = dma.vmem_to_smem %s300, 16, [#allocation2], [#allocation4]
        $region16: #{tpu_custom_call.1} parent=11 // pred_fallthru
          _
        // Predicated region
        $region17: #{tpu_custom_call.1} parent=11 // pred_check
          %p303 = pneg %p63
        $region18: #{tpu_custom_call.1} parent=11 // pred_check_branch
          %305 = sbr.rel (%p303) target = $region20
        $region19: #{tpu_custom_call.1} parent=11 // pred_region
          %s307 = ssub.s32 16, 16
          %308 = vsyncadd [#allocation6], %s307
          %s310 = sshll.u32 %s1, 4
          %s311 = int_to_ptr.vmem [resolvable:$true] %s310
          %313 = dma.vmem_to_smem %s311, 16, [#allocation5], [#allocation6]
        $region20: #{tpu_custom_call.1} parent=11 // pred_fallthru
          _
        // Predicated region
        $region21: #{tpu_custom_call.1} parent=11 // pred_check
          %p314 = pneg %p162
        $region22: #{tpu_custom_call.1} parent=11 // pred_check_branch
          %316 = sbr.rel (%p314) target = $region24
        $region23: #{tpu_custom_call.1} parent=11 // pred_region
          _
        $region24: #{tpu_custom_call.1} parent=11 // pred_fallthru
          _
        // Predicated region
        $region25: #{tpu_custom_call.1} parent=11 // pred_check
          %p317 = pneg %p183
        $region26: #{tpu_custom_call.1} parent=11 // pred_check_branch
          %319 = sbr.rel (%p317) target = $region28
        $region27: #{tpu_custom_call.1} parent=11 // pred_region
          _
        $region28: #{tpu_custom_call.1} parent=11 // pred_fallthru
          _
        // Predicated region
        $region29: #{tpu_custom_call.1} parent=11 // pred_check
          %p320 = pneg %p230
        $region30: #{tpu_custom_call.1} parent=11 // pred_check_branch
          %322 = sbr.rel (%p320) target = $region32
        $region31: #{tpu_custom_call.1} parent=11 // pred_region
          _
        $region32: #{tpu_custom_call.1} parent=11 // pred_fallthru
          _
        // Predicated region
        $region33: #{tpu_custom_call.1} parent=11 // pred_check
          %p323 = pneg %p251
        $region34: #{tpu_custom_call.1} parent=11 // pred_check_branch
          %325 = sbr.rel (%p323) target = $region36
        $region35: #{tpu_custom_call.1} parent=11 // pred_region
          _
        $region36: #{tpu_custom_call.1} parent=11 // pred_fallthru
          _
      $region12: #{tpu_custom_call.1} parent=5 // pred_fallthru
        _
      %p326 = scmp.lt.s32.totalorder %s21, 2
      // Predicated region
      $region37: #{tpu_custom_call.1} parent=5 // pred_check
        %p327 = pneg %p326
      $region38: #{tpu_custom_call.1} parent=5 // pred_check_branch
        %329 = sbr.rel (%p327) target = $region40
      $region39: #{tpu_custom_call.1} parent=5 // pred_region
        // Predicated region
        $region41: #{tpu_custom_call.1} parent=39 // pred_check
          %p330 = pneg %p83
        $region42: #{tpu_custom_call.1} parent=39 // pred_check_branch
          %332 = sbr.rel (%p330) target = $region44
        $region43: #{tpu_custom_call.1} parent=39 // pred_region
          %p333 = scmp.lt.s32.totalorder %s21, 1
          %s334 = scalar_select %p333, %s21, 1
          %s335 = smul.addr %s334, 2
          %s336 = smul.addr %s335, 4
          %s337 = scalar_lea.vmem %s2, %s336
        $region44: #{tpu_custom_call.1} parent=39 // pred_fallthru
          _
        // Predicated region
        $region45: #{tpu_custom_call.1} parent=39 // pred_check
          %p338 = pneg %p109
        $region46: #{tpu_custom_call.1} parent=39 // pred_check_branch
          %340 = sbr.rel (%p338) target = $region48
        $region47: #{tpu_custom_call.1} parent=39 // pred_region
          %p341 = scmp.lt.s32.totalorder %s21, 1
          %s342 = scalar_select %p341, %s21, 1
          %s343 = smul.addr %s342, 2
          %s344 = smul.addr %s343, 4
          %s345 = scalar_lea.vmem %s3, %s344
        $region48: #{tpu_custom_call.1} parent=39 // pred_fallthru
          _
        // Predicated region
        $region49: #{tpu_custom_call.1} parent=39 // pred_check
          %p346 = pneg %p135
        $region50: #{tpu_custom_call.1} parent=39 // pred_check_branch
          %348 = sbr.rel (%p346) target = $region52
        $region51: #{tpu_custom_call.1} parent=39 // pred_region
          %p349 = scmp.lt.s32.totalorder %s21, 1
          %s350 = scalar_select %p349, %s21, 1
          %s351 = smul.addr %s350, 2
          %s352 = smul.addr %s351, 4
          %s353 = scalar_lea.vmem %s4, %s352
        $region52: #{tpu_custom_call.1} parent=39 // pred_fallthru
          _
        // Predicated region
        $region53: #{tpu_custom_call.1} parent=39 // pred_check
          %p354 = pneg %p203
        $region54: #{tpu_custom_call.1} parent=39 // pred_check_branch
          %356 = sbr.rel (%p354) target = $region56
        $region55: #{tpu_custom_call.1} parent=39 // pred_region
          %p357 = scmp.lt.s32.totalorder %s21, 1
          %s358 = scalar_select %p357, %s21, 1
          %s359 = smul.addr %s358, 4
          %s360 = smul.addr %s359, 8
          %s361 = scalar_lea.vmem %s7, %s360
        $region56: #{tpu_custom_call.1} parent=39 // pred_fallthru
          _
      $region40: #{tpu_custom_call.1} parent=5 // pred_fallthru
        _
      %p362 = scmp.le.s32.totalorder 1, %s21
      %p363 = scmp.lt.s32.totalorder %s21, 3
      %p364 = pnand %p362, %p363
      %p365 = pneg %p364
      // Predicated region
      $region57: #{tpu_custom_call.1} parent=5 // pred_check
        _
      $region58: #{tpu_custom_call.1} parent=5 // pred_check_branch
        %367 = sbr.rel (%p364) target = $region60
      $region59: #{tpu_custom_call.1} parent=5 // pred_region
        %s368 = ssub.s32 %s21, 1
        // Predicated region
        $region61: #{tpu_custom_call.1} parent=59 // pred_check
          %p369 = pneg %p42
        $region62: #{tpu_custom_call.1} parent=59 // pred_check_branch
          %371 = sbr.rel (%p369) target = $region64
        $region63: #{tpu_custom_call.1} parent=59 // pred_region
          %372 = dma.done [#allocation4], 16
        $region64: #{tpu_custom_call.1} parent=59 // pred_fallthru
          _
        // Predicated region
        $region65: #{tpu_custom_call.1} parent=59 // pred_check
          %p373 = pneg %p63
        $region66: #{tpu_custom_call.1} parent=59 // pred_check_branch
          %375 = sbr.rel (%p373) target = $region68
        $region67: #{tpu_custom_call.1} parent=59 // pred_region
          %376 = dma.done [#allocation6], 16
        $region68: #{tpu_custom_call.1} parent=59 // pred_fallthru
          _
        %377 = sfence
        %p378 = pneg %p42
        %p379 = pneg %p39
        %p380 = pneg %p63
        %p381 = pneg %p60
        %p382 = scmp.lt.s32.totalorder %s26, 1
        %s383 = scalar_select %p382, %s26, 1
        %s384 = smul.addr %s383, 2
        %s385 = smul.addr %s384, 4
        %s386 = scalar_lea.vmem %s2, %s385
        %p387 = pneg %p89
        %p388 = pneg %p86
        %p389 = scmp.lt.s32.totalorder %s26, 1
        %s390 = scalar_select %p389, %s26, 1
        %s391 = smul.addr %s390, 2
        %s392 = smul.addr %s391, 4
        %s393 = scalar_lea.vmem %s3, %s392
        %p394 = pneg %p115
        %p395 = pneg %p112
        %p396 = scmp.lt.s32.totalorder %s26, 1
        %s397 = scalar_select %p396, %s26, 1
        %s398 = smul.addr %s397, 2
        %s399 = smul.addr %s398, 4
        %s400 = scalar_lea.vmem %s4, %s399
        %p401 = pneg %p141
        %p402 = pneg %p138
        %p403 = pneg %p162
        %p404 = pneg %p159
        %p405 = pneg %p183
        %p406 = pneg %p180
        %p407 = scmp.lt.s32.totalorder %s26, 1
        %s408 = scalar_select %p407, %s26, 1
        %s409 = smul.addr %s408, 4
        %s410 = smul.addr %s409, 8
        %s411 = scalar_lea.vmem %s7, %s410
        %p412 = pneg %p209
        %p413 = pneg %p206
        %p414 = pneg %p230
        %p415 = pneg %p227
        %p416 = pneg %p251
        %p417 = pneg %p248
        %p418 = pneg %p277
        %p419 = pneg %p274
        %s420 = sand.u32 %s264, 1
        %s421 = scalar_lea.sflag [#allocation3], %s420
        %s422 = sand.u32 %s264, 1
        %s423 = smul.addr %s422, 2
        %s424 = scalar_lea.vmem [#allocation7], %s423
        %p425 = scmp.lt.s32.totalorder %s26, 1
        %s426 = scalar_select %p425, %s26, 1
        %s427 = smul.addr %s426, 2
        %s428 = smul.addr %s427, 4
        %s429 = scalar_lea.vmem %s2, %s428
        %p430 = scmp.lt.s32.totalorder %s26, 1
        %s431 = scalar_select %p430, %s26, 1
        %s432 = smul.addr %s431, 2
        %s433 = smul.addr %s432, 4
        %s434 = scalar_lea.vmem %s3, %s433
        %p435 = scmp.lt.s32.totalorder %s26, 1
        %s436 = scalar_select %p435, %s26, 1
        %s437 = smul.addr %s436, 2
        %s438 = smul.addr %s437, 4
        %s439 = scalar_lea.vmem %s4, %s438
        %p440 = scmp.lt.s32.totalorder %s26, 1
        %s441 = scalar_select %p440, %s26, 1
        %s442 = smul.addr %s441, 4
        %s443 = smul.addr %s442, 8
        %s444 = scalar_lea.vmem %s7, %s443
        %s446 = sld [smem:[#allocation2 + %s26]]
        %s447 = sld [smem:[#allocation5 + %s26]]
        %v448 = vld [vmem:[%s429] sm:$0x77]
        %v449 = vld [vmem:[%s434] sm:$0x77]
        %v450 = vld [vmem:[%s439] sm:$0x77]
        %v451 = vld [vmem:[%s5] sm:$0xff]
        %v452 = vld [vmem:[%s5 + $0x8] sm:$0x11]
        %v453 = vstv %s446
        %v454 = vmul.f32 %v453, %v448
        %v455 = vstv %s447
        %v456 = vmul.f32 %v455, %v449
        %v457 = vadd.f32 %v454, %v456
        %v459 = vcombine.high %v457, %v457
        %v461 = vpack.c.bf16 %v457, %v457
        %v462 = vpack.c.bf16 %v459, %v459
        %v464 = vcombine.high %v450, %v450
        %v466 = vpack.c.bf16 %v450, %v450
        %v467 = vpack.c.bf16 %v464, %v464
        %v469 = vshrl.u32 %v466, 16
        %v471 = vrot.slane %v469, 6
        %v472 = vshll.u32 %v466, 16
        %v474 = vrot.slane %v472, 7
        %v475 = vor.u32 %v471, %v474
        %v477 = vshrl.u32 %v467, 16
        %v479 = vrot.slane %v477, 6
        %v480 = vshll.u32 %v467, 16
        %v482 = vrot.slane %v480, 7
        %v483 = vor.u32 %v479, %v482
        %vm486 = vcmask 1041408
        %vm487 = vsmask.f32 1280
        %vm488 = vmand %vm486, %vm487
        %v489 = vsel %vm488, %v461, %v475
        %v490 = vsel %vm488, %v462, %v483
        %493 = vrot.lane.b32.xlu0 %v489, 17
        %v494 = vpop.permute.xlu0 %493
        %495 = vrot.lane.b32.xlu0 %v490, 17
        %v496 = vpop.permute.xlu0 %495
        %vm497 = vcmask 138240
        %v498 = vsel %vm497, %v494, %v496
        %vm500 = vcmask 138240
        %v503 = vsel %vm500, 0, %v494
        %v506 = vunpack.c.l.b16 %v451
        %v507 = vunpack.c.h.b16 %v451
        %v508 = vpack.c.b16 %v506, %v506
        %v509 = vpack.c.b16 %v507, %v507
        %v511 = vpack.i.b16 %v508, %v508
        %v513 = vlaneseq
        %v514 = vshrl.u32 %v513, 7
        %v515 = vsub.s32 0, %v514
        %v516 = vrot.slane %v511, %v515
        %v518 = vpack.i.b16 %v509, %v509
        %v520 = vlaneseq
        %v521 = vshrl.u32 %v520, 7
        %v522 = vsub.s32 0, %v521
        %v523 = vrot.slane %v518, %v522
        %v524 = vmul.bf16 %v503, %v516
        %v525 = vmul.bf16 %v498, %v523
        %526 = vrot.lane.b32.xlu0 %v489, 16
        %v527 = vpop.permute.xlu0 %526
        %528 = vrot.lane.b32.xlu0 %v490, 16
        %v529 = vpop.permute.xlu0 %528
        %vm530 = vcmask 130048
        %v531 = vsel %vm530, %v527, %v529
        %vm533 = vcmask 130048
        %v535 = vsel %vm533, 0, %v527
        %v537 = vshrl.u32 %v508, 16
        %v538 = vpack.i.b16 %v537, %v537
        %v540 = vlaneseq
        %v541 = vshrl.u32 %v540, 7
        %v542 = vsub.s32 0, %v541
        %v543 = vrot.slane %v538, %v542
        %v544 = vshrl.u32 %v509, 16
        %v545 = vpack.i.b16 %v544, %v544
        %v547 = vlaneseq
        %v548 = vshrl.u32 %v547, 7
        %v549 = vsub.s32 0, %v548
        %v550 = vrot.slane %v545, %v549
        %v551 = vmul.bf16 %v535, %v543
        %v552 = vmul.bf16 %v531, %v550
        %553 = vrot.lane.b32.xlu0 %v489, 15
        %v554 = vpop.permute.xlu0 %553
        %555 = vrot.lane.b32.xlu0 %v490, 15
        %v556 = vpop.permute.xlu0 %555
        %vm557 = vcmask 121856
        %v558 = vsel %vm557, %v554, %v556
        %vm560 = vcmask 121856
        %v562 = vsel %vm560, 0, %v554
        %v564 = vlaneseq
        %v565 = vshrl.u32 %v564, 7
        %v566 = vsub.s32 1, %v565
        %v567 = vrot.slane %v511, %v566
        %v568 = vlaneseq
        %v569 = vshrl.u32 %v568, 7
        %v570 = vsub.s32 1, %v569
        %v571 = vrot.slane %v518, %v570
        %v572 = vmul.bf16 %v562, %v567
        %v573 = vmul.bf16 %v558, %v571
        %574 = vrot.lane.b32.xlu0 %v489, 1
        %v575 = vpop.permute.xlu0 %574
        %576 = vrot.lane.b32.xlu0 %v490, 1
        %v577 = vpop.permute.xlu0 %576
        %vm578 = vcmask 7168
        %v579 = vsel %vm578, %v575, %v577
        %vm581 = vcmask 7168
        %v583 = vsel %vm581, 0, %v575
        %v585 = vlaneseq
        %v586 = vshrl.u32 %v585, 7
        %v587 = vsub.s32 1, %v586
        %v588 = vrot.slane %v538, %v587
        %v589 = vlaneseq
        %v590 = vshrl.u32 %v589, 7
        %v591 = vsub.s32 1, %v590
        %v592 = vrot.slane %v545, %v591
        %v593 = vmul.bf16 %v583, %v588
        %v594 = vmul.bf16 %v579, %v592
        %v595 = vlaneseq
        %v596 = vshrl.u32 %v595, 7
        %v597 = vsub.s32 2, %v596
        %v598 = vrot.slane %v511, %v597
        %v599 = vlaneseq
        %v600 = vshrl.u32 %v599, 7
        %v601 = vsub.s32 2, %v600
        %v602 = vrot.slane %v518, %v601
        %v603 = vmul.bf16 %v489, %v598
        %v604 = vmul.bf16 %v490, %v602
        %605 = vrot.lane.b32.xlu0 %v489, 127
        %v606 = vpop.permute.xlu0 %605
        %607 = vrot.lane.b32.xlu0 %v490, 127
        %v608 = vpop.permute.xlu0 %607
        %vm609 = vcmask 1039360
        %v610 = vsel %vm609, %v606, %v608
        %vm612 = vcmask 1039360
        %v614 = vsel %vm612, %v608, 0
        %v616 = vlaneseq
        %v617 = vshrl.u32 %v616, 7
        %v618 = vsub.s32 2, %v617
        %v619 = vrot.slane %v538, %v618
        %v620 = vlaneseq
        %v621 = vshrl.u32 %v620, 7
        %v622 = vsub.s32 2, %v621
        %v623 = vrot.slane %v545, %v622
        %v624 = vmul.bf16 %v610, %v619
        %v625 = vmul.bf16 %v614, %v623
        %626 = vrot.lane.b32.xlu0 %v489, 113
        %v627 = vpop.permute.xlu0 %626
        %628 = vrot.lane.b32.xlu0 %v490, 113
        %v629 = vpop.permute.xlu0 %628
        %vm630 = vcmask 924672
        %v631 = vsel %vm630, %v627, %v629
        %vm633 = vcmask 924672
        %v635 = vsel %vm633, %v629, 0
        %v637 = vlaneseq
        %v638 = vshrl.u32 %v637, 7
        %v639 = vsub.s32 3, %v638
        %v640 = vrot.slane %v511, %v639
        %v641 = vlaneseq
        %v642 = vshrl.u32 %v641, 7
        %v643 = vsub.s32 3, %v642
        %v644 = vrot.slane %v518, %v643
        %v645 = vmul.bf16 %v631, %v640
        %v646 = vmul.bf16 %v635, %v644
        %647 = vrot.lane.b32.xlu0 %v489, 112
        %v648 = vpop.permute.xlu0 %647
        %649 = vrot.lane.b32.xlu0 %v490, 112
        %v650 = vpop.permute.xlu0 %649
        %vm651 = vcmask 916480
        %v652 = vsel %vm651, %v648, %v650
        %vm654 = vcmask 916480
        %v656 = vsel %vm654, %v650, 0
        %v658 = vlaneseq
        %v659 = vshrl.u32 %v658, 7
        %v660 = vsub.s32 3, %v659
        %v661 = vrot.slane %v538, %v660
        %v662 = vlaneseq
        %v663 = vshrl.u32 %v662, 7
        %v664 = vsub.s32 3, %v663
        %v665 = vrot.slane %v545, %v664
        %v666 = vmul.bf16 %v652, %v661
        %v667 = vmul.bf16 %v656, %v665
        %668 = vrot.lane.b32.xlu0 %v489, 111
        %v669 = vpop.permute.xlu0 %668
        %670 = vrot.lane.b32.xlu0 %v490, 111
        %v671 = vpop.permute.xlu0 %670
        %vm672 = vcmask 908288
        %v673 = vsel %vm672, %v669, %v671
        %vm675 = vcmask 908288
        %v677 = vsel %vm675, %v671, 0
        %v680 = vunpack.c.l.b16 %v452
        %v681 = vunpack.c.h.b16 %v452
        %v682 = vpack.c.b16 %v680, %v680
        %v683 = vpack.c.b16 %v681, %v681
        %v685 = vpack.i.b16 %v682, %v682
        %v687 = vlaneseq
        %v688 = vshrl.u32 %v687, 7
        %v689 = vsub.s32 0, %v688
        %v690 = vrot.slane %v685, %v689
        %v692 = vpack.i.b16 %v683, %v683
        %v694 = vlaneseq
        %v695 = vshrl.u32 %v694, 7
        %v696 = vsub.s32 0, %v695
        %v697 = vrot.slane %v692, %v696
        %v698 = vmul.bf16 %v673, %v690
        %v699 = vmul.bf16 %v677, %v697
        %v702 = vrot.slane %v551, 5
        %v703 = vrot.slane %v552, 5
        %v706 = vrot.slane %v572, 2
        %v707 = vrot.slane %v573, 2
        %v710 = vrot.slane %v593, 7
        %v711 = vrot.slane %v594, 7
        %v714 = vrot.slane %v603, 4
        %v715 = vrot.slane %v604, 4
        %v718 = vrot.slane %v624, 1
        %v719 = vrot.slane %v625, 1
        %v722 = vrot.slane %v645, 6
        %v723 = vrot.slane %v646, 6
        %v726 = vrot.slane %v666, 3
        %v727 = vrot.slane %v667, 3
        %vm728 = vcmask 1042432
        %v731 = vsel %vm728, %v524, %v702
        %v734 = vsel %vm728, %v525, %v703
        %vm735 = vcmask 1045504
        %v737 = vsel %vm735, %v731, %v706
        %v740 = vsel %vm735, %v734, %v707
        %vm742 = vcmask 1040384
        %v744 = vsel %vm742, %v706, %v710
        %v746 = vsel %vm742, %v707, %v711
        %vm747 = vcmask 1043456
        %v749 = vsel %vm747, %v744, %v714
        %v751 = vsel %vm747, %v746, %v715
        %vm752 = vcmask 1046528
        %v754 = vsel %vm752, %v749, %v718
        %v757 = vsel %vm752, %v751, %v719
        %vm759 = vcmask 1041408
        %v761 = vsel %vm759, %v718, %v722
        %v763 = vsel %vm759, %v719, %v723
        %vm764 = vcmask 1044480
        %v766 = vsel %vm764, %v761, %v726
        %v769 = vsel %vm764, %v763, %v727
        %v771 = vld [vmem:[%s6] sm:$0xf]
        %v772 = vld [vmem:[%s6 + $0x4] sm:$0xf]
        %v773 = vld [vmem:[%s6 + $0x8] sm:$0xf]
        %v774 = vld [vmem:[%s6 + $0xc] sm:$0xf]
        %v775 = vld [vmem:[%s444] sm:$0xff]
        %v776 = vld [vmem:[%s444 + $0x8] sm:$0xff]
        %v777 = vld [vmem:[%s444 + $0x10] sm:$0xff]
        %v778 = vld [vmem:[%s444 + $0x18] sm:$0xff]
        %780 = vset.pattern.permute.xlu0 0
        %781 = vperm.xlu0 %780, %v775
        %v782 = vpop.permute.xlu0 %781
        %785 = vset.pattern.permute.xlu0 0
        %786 = vperm.xlu0 %785, %v776
        %v787 = vpop.permute.xlu0 %786
        %790 = vset.pattern.permute.xlu0 0
        %791 = vperm.xlu0 %790, %v777
        %v792 = vpop.permute.xlu0 %791
        %795 = vset.pattern.permute.xlu0 0
        %796 = vperm.xlu0 %795, %v778
        %v797 = vpop.permute.xlu0 %796
        %v803 = vunpack.c.l.b16 %v771
        %v804 = vunpack.c.l.b16 %v772
        %v805 = vunpack.c.l.b16 %v773
        %v806 = vunpack.c.l.b16 %v774
        %v807 = vpack.c.b16 %v804, %v803
        %v808 = vpack.c.b16 %v806, %v805
        %vm809 = vcmask 441344
        %v811 = vsel %vm809, %v807, 0
        %v814 = vsel %vm809, %v808, 0
        %v817 = vsel %vm728, %v698, 0
        %v820 = vsel %vm728, %v699, 0
        %822 = vmatprep.subr.bf16.mxu0 0
        %823 = vmatpush1.bf16.msra.mxu0 0
        %824 = vmatprep.subr.bf16.mxu0 0
        %825 = vmatpush1.bf16.msra.mxu0 0
        %826 = vmatprep.subr.bf16.mxu0 0
        %827 = vmatpush1.bf16.msra.mxu0 0
        %828 = vmatprep.subr.bf16.mxu0 0
        %829 = vmatpush1.bf16.msra.mxu0 0
        %830 = vmatprep.subr.bf16.mxu0 %v820
        %831 = vmatpush1.bf16.msra.mxu0 %v817
        %832 = vmatprep.subr.bf16.mxu0 %v769
        %833 = vmatpush1.bf16.msra.mxu0 %v766
        %834 = vmatprep.subr.bf16.mxu0 %v757
        %835 = vmatpush1.bf16.msra.mxu0 %v754
        %836 = vmatprep.subr.bf16.mxu0 %v740
        %837 = vmatpush1.bf16.msra.mxu0 %v737
        %838 = vmatprep.subr.bf16.mxu0 0
        %839 = vmatpush2.bf16.msra.mxu0 0
        %840 = vmatprep.subr.bf16.mxu0 0
        %841 = vmatpush2.bf16.msra.mxu0 0
        %842 = vmatprep.subr.bf16.mxu0 0
        %843 = vmatpush2.bf16.msra.mxu0 0
        %844 = vmatprep.subr.bf16.mxu0 0
        %845 = vmatpush2.bf16.msra.mxu0 0
        %846 = vmatprep.subr.bf16.mxu0 0
        %847 = vmatpush2.bf16.msra.mxu0 0
        %848 = vmatprep.subr.bf16.mxu0 0
        %849 = vmatpush2.bf16.msra.mxu0 0
        %850 = vmatprep.subr.bf16.mxu0 0
        %851 = vmatpush2.bf16.msra.mxu0 0
        %852 = vmatprep.subr.bf16.mxu0 0
        %853 = vmatpush2.bf16.msra.mxu0 0
        %854 = vmatprep.mubr.bf16.mxu0 0
        %855 = vmatmul.mubr.bf16.gmra.mxu0 %v811
        %v856 = vpop.f32.mrf.mxu0
        %v857 = vadd.f32 %v782, %v856
        %v858 = vpop.f32.mrf.mxu0
        %v859 = vadd.f32 %v782, %v858
        %v860 = vpop.f32.mrf.mxu0
        %v861 = vadd.f32 %v787, %v860
        %v862 = vpop.f32.mrf.mxu0
        %v863 = vadd.f32 %v787, %v862
        %864 = vmatprep.mubr.bf16.mxu0 0
        %865 = vmatmul.mubr.bf16.gmra.mxu0 %v814
        %v866 = vpop.f32.mrf.mxu0
        %v867 = vadd.f32 %v792, %v866
        %v868 = vpop.f32.mrf.mxu0
        %v869 = vadd.f32 %v792, %v868
        %v870 = vpop.f32.mrf.mxu0
        %v871 = vadd.f32 %v797, %v870
        %v872 = vpop.f32.mrf.mxu0
        %v873 = vadd.f32 %v797, %v872
        %874 = vdwg.mxu0
        %v875 = vmax.f32 %v857, 0.0
        %v876 = vmax.f32 %v859, 0.0
        %v877 = vmax.f32 %v861, 0.0
        %v878 = vmax.f32 %v863, 0.0
        %v879 = vmax.f32 %v867, 0.0
        %v880 = vmax.f32 %v869, 0.0
        %v881 = vmax.f32 %v871, 0.0
        %v882 = vmax.f32 %v873, 0.0
        %v883 = vpack.c.bf16 %v877, %v875
        %v884 = vpack.c.bf16 %v878, %v876
        %v885 = vpack.c.bf16 %v881, %v879
        %v886 = vpack.c.bf16 %v882, %v880
        %891 = vrot.lane.b32.xlu0 %v883, 17
        %v892 = vpop.permute.xlu0 %891
        %893 = vrot.lane.b32.xlu0 %v884, 17
        %v894 = vpop.permute.xlu0 %893
        %895 = vrot.lane.b32.xlu0 %v885, 17
        %v896 = vpop.permute.xlu0 %895
        %897 = vrot.lane.b32.xlu0 %v886, 17
        %v898 = vpop.permute.xlu0 %897
        %v899 = vsel %vm497, %v892, %v894
        %v900 = vsel %vm497, %v896, %v898
        %v904 = vsel %vm500, 0, %v892
        %v907 = vsel %vm500, 0, %v896
        %v909 = vmul.bf16 %v904, %v516
        %v910 = vmul.bf16 %v899, %v523
        %v911 = vmul.bf16 %v907, %v516
        %v912 = vmul.bf16 %v900, %v523
        %913 = vrot.lane.b32.xlu0 %v883, 16
        %v914 = vpop.permute.xlu0 %913
        %915 = vrot.lane.b32.xlu0 %v884, 16
        %v916 = vpop.permute.xlu0 %915
        %917 = vrot.lane.b32.xlu0 %v885, 16
        %v918 = vpop.permute.xlu0 %917
        %919 = vrot.lane.b32.xlu0 %v886, 16
        %v920 = vpop.permute.xlu0 %919
        %v921 = vsel %vm530, %v914, %v916
        %v922 = vsel %vm530, %v918, %v920
        %v926 = vsel %vm533, 0, %v914
        %v929 = vsel %vm533, 0, %v918
        %v931 = vmul.bf16 %v926, %v543
        %v932 = vmul.bf16 %v921, %v550
        %v933 = vmul.bf16 %v929, %v543
        %v934 = vmul.bf16 %v922, %v550
        %935 = vrot.lane.b32.xlu0 %v883, 15
        %v936 = vpop.permute.xlu0 %935
        %937 = vrot.lane.b32.xlu0 %v884, 15
        %v938 = vpop.permute.xlu0 %937
        %939 = vrot.lane.b32.xlu0 %v885, 15
        %v940 = vpop.permute.xlu0 %939
        %941 = vrot.lane.b32.xlu0 %v886, 15
        %v942 = vpop.permute.xlu0 %941
        %v943 = vsel %vm557, %v936, %v938
        %v944 = vsel %vm557, %v940, %v942
        %v948 = vsel %vm560, 0, %v936
        %v951 = vsel %vm560, 0, %v940
        %v953 = vmul.bf16 %v948, %v567
        %v954 = vmul.bf16 %v943, %v571
        %v955 = vmul.bf16 %v951, %v567
        %v956 = vmul.bf16 %v944, %v571
        %957 = vrot.lane.b32.xlu0 %v883, 1
        %v958 = vpop.permute.xlu0 %957
        %959 = vrot.lane.b32.xlu0 %v884, 1
        %v960 = vpop.permute.xlu0 %959
        %961 = vrot.lane.b32.xlu0 %v885, 1
        %v962 = vpop.permute.xlu0 %961
        %963 = vrot.lane.b32.xlu0 %v886, 1
        %v964 = vpop.permute.xlu0 %963
        %v965 = vsel %vm578, %v958, %v960
        %v966 = vsel %vm578, %v962, %v964
        %v970 = vsel %vm581, 0, %v958
        %v973 = vsel %vm581, 0, %v962
        %v975 = vmul.bf16 %v970, %v588
        %v976 = vmul.bf16 %v965, %v592
        %v977 = vmul.bf16 %v973, %v588
        %v978 = vmul.bf16 %v966, %v592
        %v979 = vmul.bf16 %v883, %v598
        %v980 = vmul.bf16 %v884, %v602
        %v981 = vmul.bf16 %v885, %v598
        %v982 = vmul.bf16 %v886, %v602
        %983 = vrot.lane.b32.xlu0 %v883, 127
        %v984 = vpop.permute.xlu0 %983
        %985 = vrot.lane.b32.xlu0 %v884, 127
        %v986 = vpop.permute.xlu0 %985
        %987 = vrot.lane.b32.xlu0 %v885, 127
        %v988 = vpop.permute.xlu0 %987
        %989 = vrot.lane.b32.xlu0 %v886, 127
        %v990 = vpop.permute.xlu0 %989
        %v991 = vsel %vm609, %v984, %v986
        %v992 = vsel %vm609, %v988, %v990
        %v996 = vsel %vm612, %v986, 0
        %v999 = vsel %vm612, %v990, 0
        %v1001 = vmul.bf16 %v991, %v619
        %v1002 = vmul.bf16 %v996, %v623
        %v1003 = vmul.bf16 %v992, %v619
        %v1004 = vmul.bf16 %v999, %v623
        %1005 = vrot.lane.b32.xlu0 %v883, 113
        %v1006 = vpop.permute.xlu0 %1005
        %1007 = vrot.lane.b32.xlu0 %v884, 113
        %v1008 = vpop.permute.xlu0 %1007
        %1009 = vrot.lane.b32.xlu0 %v885, 113
        %v1010 = vpop.permute.xlu0 %1009
        %1011 = vrot.lane.b32.xlu0 %v886, 113
        %v1012 = vpop.permute.xlu0 %1011
        %v1013 = vsel %vm630, %v1006, %v1008
        %v1014 = vsel %vm630, %v1010, %v1012
        %v1018 = vsel %vm633, %v1008, 0
        %v1021 = vsel %vm633, %v1012, 0
        %v1023 = vmul.bf16 %v1013, %v640
        %v1024 = vmul.bf16 %v1018, %v644
        %v1025 = vmul.bf16 %v1014, %v640
        %v1026 = vmul.bf16 %v1021, %v644
        %1027 = vrot.lane.b32.xlu0 %v883, 112
        %v1028 = vpop.permute.xlu0 %1027
        %1029 = vrot.lane.b32.xlu0 %v884, 112
        %v1030 = vpop.permute.xlu0 %1029
        %1031 = vrot.lane.b32.xlu0 %v885, 112
        %v1032 = vpop.permute.xlu0 %1031
        %1033 = vrot.lane.b32.xlu0 %v886, 112
        %v1034 = vpop.permute.xlu0 %1033
        %v1035 = vsel %vm651, %v1028, %v1030
        %v1036 = vsel %vm651, %v1032, %v1034
        %v1040 = vsel %vm654, %v1030, 0
        %v1043 = vsel %vm654, %v1034, 0
        %v1045 = vmul.bf16 %v1035, %v661
        %v1046 = vmul.bf16 %v1040, %v665
        %v1047 = vmul.bf16 %v1036, %v661
        %v1048 = vmul.bf16 %v1043, %v665
        %1049 = vrot.lane.b32.xlu0 %v883, 111
        %v1050 = vpop.permute.xlu0 %1049
        %1051 = vrot.lane.b32.xlu0 %v884, 111
        %v1052 = vpop.permute.xlu0 %1051
        %1053 = vrot.lane.b32.xlu0 %v885, 111
        %v1054 = vpop.permute.xlu0 %1053
        %1055 = vrot.lane.b32.xlu0 %v886, 111
        %v1056 = vpop.permute.xlu0 %1055
        %v1057 = vsel %vm672, %v1050, %v1052
        %v1058 = vsel %vm672, %v1054, %v1056
        %v1062 = vsel %vm675, %v1052, 0
        %v1065 = vsel %vm675, %v1056, 0
        %v1067 = vmul.bf16 %v1057, %v690
        %v1068 = vmul.bf16 %v1062, %v697
        %v1069 = vmul.bf16 %v1058, %v690
        %v1070 = vmul.bf16 %v1065, %v697
        %v1071 = vld [vmem:[%s8] sm:$0x3f]
        %v1072 = vld [vmem:[%s9] sm:$0x7]
        %1074 = vset.pattern.permute.xlu0 0
        %1075 = vperm.xlu0 %1074, %v1072
        %v1076 = vpop.permute.xlu0 %1075
        %v1079 = vcombine.high %v1071, %v1071
        %v1081 = vunpack.c.l.s4 1983009808
        %v1082 = vunpack.c.0.s8 %v1081
        %v1083 = vlaneseq
        %v1084 = vshrl.u32 %v1083, 7
        %v1085 = vsub.s32 %v1082, %v1084
        %v1086 = vrot.slane %v1071, %v1085
        %v1088 = vunpack.c.l.s4 1983009808
        %v1089 = vunpack.c.0.s8 %v1088
        %v1090 = vlaneseq
        %v1091 = vshrl.u32 %v1090, 7
        %v1092 = vsub.s32 %v1089, %v1091
        %v1093 = vrot.slane %v1079, %v1092
        %v1094 = vcombine.high %v1086, %v1086
        %vm1097 = vcmask 261120
        %v1099 = vsel %vm1097, %v1093, 0
        %1101 = vmatprep.subr.bf16.mxu0 %v978
        %1102 = vmatpush1.bf16.msra.mxu0 %v977
        %1103 = vmatprep.subr.bf16.mxu0 %v976
        %1104 = vmatpush1.bf16.msra.mxu0 %v975
        %1105 = vmatprep.subr.bf16.mxu0 %v956
        %1106 = vmatpush1.bf16.msra.mxu0 %v955
        %1107 = vmatprep.subr.bf16.mxu0 %v954
        %1108 = vmatpush1.bf16.msra.mxu0 %v953
        %1109 = vmatprep.subr.bf16.mxu0 %v934
        %1110 = vmatpush1.bf16.msra.mxu0 %v933
        %1111 = vmatprep.subr.bf16.mxu0 %v932
        %1112 = vmatpush1.bf16.msra.mxu0 %v931
        %1113 = vmatprep.subr.bf16.mxu0 %v912
        %1114 = vmatpush1.bf16.msra.mxu0 %v911
        %1115 = vmatprep.subr.bf16.mxu0 %v910
        %1116 = vmatpush1.bf16.msra.mxu0 %v909
        %1117 = vmatprep.subr.bf16.mxu0 %v1048
        %1118 = vmatpush2.bf16.msra.mxu0 %v1047
        %1119 = vmatprep.subr.bf16.mxu0 %v1046
        %1120 = vmatpush2.bf16.msra.mxu0 %v1045
        %1121 = vmatprep.subr.bf16.mxu0 %v1026
        %1122 = vmatpush2.bf16.msra.mxu0 %v1025
        %1123 = vmatprep.subr.bf16.mxu0 %v1024
        %1124 = vmatpush2.bf16.msra.mxu0 %v1023
        %1125 = vmatprep.subr.bf16.mxu0 %v1004
        %1126 = vmatpush2.bf16.msra.mxu0 %v1003
        %1127 = vmatprep.subr.bf16.mxu0 %v1002
        %1128 = vmatpush2.bf16.msra.mxu0 %v1001
        %1129 = vmatprep.subr.bf16.mxu0 %v982
        %1130 = vmatpush2.bf16.msra.mxu0 %v981
        %1131 = vmatprep.subr.bf16.mxu0 %v980
        %1132 = vmatpush2.bf16.msra.mxu0 %v979
        %1133 = vmatprep.mubr.bf16.mxu0 %v1094
        %1134 = vmatmul.mubr.bf16.gmra.mxu0 %v1086
        %v1135 = vpop.f32.mrf.mxu0
        %v1136 = vadd.f32 %v1076, %v1135
        %v1137 = vpop.f32.mrf.mxu0
        %v1138 = vadd.f32 %v1076, %v1137
        %v1139 = vpop.f32.mrf.mxu0
        %v1140 = vpop.f32.mrf.mxu0
        %1141 = vdwg.mxu0
        %1142 = vmatprep.subr.bf16.mxu0 0
        %1143 = vmatpush1.bf16.msra.mxu0 0
        %1144 = vmatprep.subr.bf16.mxu0 0
        %1145 = vmatpush1.bf16.msra.mxu0 0
        %1146 = vmatprep.subr.bf16.mxu0 0
        %1147 = vmatpush1.bf16.msra.mxu0 0
        %1148 = vmatprep.subr.bf16.mxu0 0
        %1149 = vmatpush1.bf16.msra.mxu0 0
        %1150 = vmatprep.subr.bf16.mxu0 0
        %1151 = vmatpush1.bf16.msra.mxu0 0
        %1152 = vmatprep.subr.bf16.mxu0 0
        %1153 = vmatpush1.bf16.msra.mxu0 0
        %1154 = vmatprep.subr.bf16.mxu0 %v1070
        %1155 = vmatpush1.bf16.msra.mxu0 %v1069
        %1156 = vmatprep.subr.bf16.mxu0 %v1068
        %1157 = vmatpush1.bf16.msra.mxu0 %v1067
        %1158 = vmatprep.subr.bf16.mxu0 0
        %1159 = vmatpush2.bf16.msra.mxu0 0
        %1160 = vmatprep.subr.bf16.mxu0 0
        %1161 = vmatpush2.bf16.msra.mxu0 0
        %1162 = vmatprep.subr.bf16.mxu0 0
        %1163 = vmatpush2.bf16.msra.mxu0 0
        %1164 = vmatprep.subr.bf16.mxu0 0
        %1165 = vmatpush2.bf16.msra.mxu0 0
        %1166 = vmatprep.subr.bf16.mxu0 0
        %1167 = vmatpush2.bf16.msra.mxu0 0
        %1168 = vmatprep.subr.bf16.mxu0 0
        %1169 = vmatpush2.bf16.msra.mxu0 0
        %1170 = vmatprep.subr.bf16.mxu0 0
        %1171 = vmatpush2.bf16.msra.mxu0 0
        %1172 = vmatprep.subr.bf16.mxu0 0
        %1173 = vmatpush2.bf16.msra.mxu0 0
        %1174 = vmatprep.mubr.bf16.mxu0 0
        %1175 = vmatmul.mubr.bf16.gmra.mxu0 %v1099
        %v1176 = vpop.f32.mrf.mxu0
        %v1177 = vadd.f32 %v1136, %v1176
        %v1178 = vpop.f32.mrf.mxu0
        %v1179 = vadd.f32 %v1138, %v1178
        %v1180 = vpop.f32.mrf.mxu0
        %v1181 = vpop.f32.mrf.mxu0
        %1182 = vdwg.mxu0
        %v1184 = vcombine.high %v449, %v449
        %v1186 = vsub.f32 %v1177, %v449
        %v1187 = vsub.f32 %v1179, %v1184
        %v1188 = vmul.f32 %v1186, %v1186
        %v1189 = vmul.f32 %v1187, %v1187
        %v1190 = vadd.f32 %v1188, 1e-06
        %v1191 = vadd.f32 %v1189, 1e-06
        %v1192 = vrsqrt.pop %v1190
        %v1193 = vmul.f32 %v1190, %v1192
        %vm1194 = vcmp.eq.f32.partialorder %v1190, inf
        %v1195 = vsel %vm1194, %v1190, %v1193
        %vm1196 = vcmp.eq.f32.partialorder %v1190, 0.0
        %v1197 = vand.u32 %v1190, 2147483648
        %v1198 = vsel %vm1196, %v1197, %v1195
        %v1199 = vrsqrt.pop %v1191
        %v1200 = vmul.f32 %v1191, %v1199
        %vm1201 = vcmp.eq.f32.partialorder %v1191, inf
        %v1202 = vsel %vm1201, %v1191, %v1200
        %vm1203 = vcmp.eq.f32.partialorder %v1191, 0.0
        %v1204 = vand.u32 %v1191, 2147483648
        %v1205 = vsel %vm1203, %v1204, %v1202
        %v1206 = vsel %vm728, %v1198, 0.0
        %v1207 = vrot.slane %v1206, 4
        %v1208 = vadd.f32 %v1206, %v1207
        %v1209 = vrot.slane %v1208, 2
        %v1210 = vadd.f32 %v1208, %v1209
        %v1211 = vrot.slane %v1210, 1
        %v1212 = vadd.f32 %v1210, %v1211
        %v1213 = vsel %vm728, %v1205, 0.0
        %v1214 = vrot.slane %v1213, 4
        %v1215 = vadd.f32 %v1213, %v1214
        %v1216 = vrot.slane %v1215, 2
        %v1217 = vadd.f32 %v1215, %v1216
        %v1218 = vrot.slane %v1217, 1
        %v1219 = vadd.f32 %v1217, %v1218
        %v1222 = vcombine.low %v1212, %v1219
        %v1224 = vunpack.c.l.s4 1966171168
        %v1225 = vunpack.c.0.s8 %v1224
        %v1226 = vlaneseq
        %v1227 = vshrl.u32 %v1226, 7
        %v1228 = vsub.s32 %v1225, %v1227
        %v1229 = vrot.slane %v1222, %v1228
        %v1231 = vunpack.c.l.s4 1966171168
        %v1232 = vunpack.c.0.s8 %v1231
        %v1233 = vlaneseq
        %v1234 = vshrl.u32 %v1233, 7
        %v1235 = vsub.s32 %v1232, %v1234
        %v1236 = vrot.slane %v1229, %v1235
        %v1238 = vlaneseq
        %vm1239 = vcmp.ge.s32.totalorder %v1238, 0
        %vm1240 = vcmp.lt.s32.totalorder %v1238, 256
        %vm1241 = vmand %vm1239, %vm1240
        %1242 = vst.msk [vmem:[%s424] sm:$0x3] %vm1241, %v1236
        %s1243 = sand.u32 %s264, 1
        %s1244 = scalar_lea.sflag [#allocation3], %s1243
        %s1245 = sand.u32 %s264, 1
        %s1246 = smul.addr %s1245, 2
        %s1247 = scalar_lea.vmem [#allocation7], %s1246
        // Predicated region
        $region69: #{tpu_custom_call.1} parent=59 // pred_check
          %p1248 = pneg %p274
        $region70: #{tpu_custom_call.1} parent=59 // pred_check_branch
          %1250 = sbr.rel (%p1248) target = $region72
        $region71: #{tpu_custom_call.1} parent=59 // pred_region
          %s1252 = ssub.s32 32, 32
          %1253 = vsyncadd %s1244, %s1252
          %s1254 = smul.addr %s26, 2
          %s1255 = smul.addr %s1254, 16
          %s1256 = scalar_lea.hbm %s10, %s1255
          %s1258 = sshll.u32 %s1247, 4
          %s1259 = int_to_ptr.vmem [resolvable:$true] %s1258
          %1261 = dma.vmem_to_hbm [thread:$0]  %s1259, 32, %s1256, %s1244
        $region72: #{tpu_custom_call.1} parent=59 // pred_fallthru
          _
      $region60: #{tpu_custom_call.1} parent=5 // pred_fallthru
        _
      %p1262 = scmp.le.s32.totalorder 2, %s21
      // Predicated region
      $region73: #{tpu_custom_call.1} parent=5 // pred_check
        %p1263 = pneg %p1262
      $region74: #{tpu_custom_call.1} parent=5 // pred_check_branch
        %1265 = sbr.rel (%p1263) target = $region76
      $region75: #{tpu_custom_call.1} parent=5 // pred_region
        %s1266 = ssub.s32 %s21, 2
        // Predicated region
        $region77: #{tpu_custom_call.1} parent=75 // pred_check
          %p1267 = pneg %p280
        $region78: #{tpu_custom_call.1} parent=75 // pred_check_branch
          %1269 = sbr.rel (%p1267) target = $region80
        $region79: #{tpu_custom_call.1} parent=75 // pred_region
          %s1270 = sand.u32 %s265, 1
          %s1271 = scalar_lea.sflag [#allocation3], %s1270
          %s1272 = sand.u32 %s265, 1
          %s1273 = smul.addr %s1272, 2
          %s1274 = scalar_lea.vmem [#allocation7], %s1273
          %1275 = dma.done %s1271, 32
        $region80: #{tpu_custom_call.1} parent=75 // pred_fallthru
          _
      $region76: #{tpu_custom_call.1} parent=5 // pred_fallthru
        _
    $region6: #{tpu_custom_call.1} parent=1 // loop_footer
      %s25 = sadd.s32 1, %s21
    $region7: #{tpu_custom_call.1} parent=1 // loop_footer_branch
      %20 = sbr.rel target = $region3
    $region8: #{tpu_custom_call.1} parent=1 // loop_exit
      _
    %1276 = vsyncpa [#allocation3], 1
    %s1277 = scalar_lea.sflag [#allocation3], 1
    %1278 = vsyncpa %s1277, 1
    %1279 = vsyncpa [#allocation4], 1
    %s1280 = scalar_lea.sflag [#allocation4], 1
    %1281 = vsyncpa %s1280, 1
    %1282 = vsyncpa [#allocation6], 1

</llo_original>
